<compile_context>
chip_gen: v5e
topology: v5e:2x2
jax: 0.10.0
libtpu: 0.0.40
codegen_flags: <defaults>
</compile_context>

<pallas_src>
import jax
import jax.numpy as jnp
from jax.experimental import pallas as pl
from jax.experimental.pallas import tpu as pltpu

EPS = 1e-5  # InstanceNorm1d default eps
HI = jax.lax.Precision.HIGHEST


# ----------------------------------------------------------------------------
# Fused Pallas kernel: all layers of AdaResBlock for one batch element.
# ----------------------------------------------------------------------------
def _make_fused_kernel(C, T, K, dilations, compute_dtype):
    L = len(dilations)
    inv_T = 1.0 / T

    def shifted_taps(xc, d):
        # Stack the K "same"-padding taps of a dilated conv along the sublane
        # (channel) axis: row block k holds x[:, t + k*d - pad] (zeros at edges).
        pad = (K - 1) * d // 2
        if pad > 0:
            z = jnp.zeros((C, pad), xc.dtype)
            xp = jnp.concatenate([z, xc, z], axis=1)          # (C, T + 2*pad)
        else:
            xp = xc
        # TODO(synk): at production T, build the taps with pltpu.roll + a lane
        # mask to keep the per-tap copies on the XLU slot instead of VPU selects.
        return jnp.concatenate([xp[:, k * d: k * d + T] for k in range(K)],
                               axis=0)                         # (K*C, T)

    def adain(xc, g, b):
        # InstanceNorm1d(affine=False) over T with one-pass stats, then
        # g * xn + b where g already contains the (1 + gamma) term.
        mean = jnp.sum(xc, axis=1, keepdims=True) * inv_T
        ex2 = jnp.sum(xc * xc, axis=1, keepdims=True) * inv_T
        var = jnp.maximum(ex2 - mean * mean, 0.0)
        return g * ((xc - mean) * jax.lax.rsqrt(var + EPS)) + b

    def conv(xc, w, cb, d):
        # Single MXU matmul per conv: (C, K*C) @ (K*C, T), f32 accumulation.
        taps = shifted_taps(xc, d).astype(compute_dtype)
        return jnp.dot(w, taps, preferred_element_type=jnp.float32) + cb

    def kernel(x_ref, mods_ref, bias_ref, w1_ref, w2_ref, o_ref):
        x = x_ref[0].astype(jnp.float32)       # (C, T)
        mods = mods_ref[0]                     # (C, 4L): [1+g1, b1, 1+g2, b2] per layer
        biases = bias_ref[...]                 # (C, 2L): [conv1 bias, conv2 bias] per layer

        # TODO(synk): leaky_clamp(x, -1e10, 1e10) is the identity for finite
        # activations and is folded away (module defaults: activation=False,
        # dropout_p=0.0, harmonics=None).
        for l in range(L):                     # unrolled; x stays resident on-chip
            g1 = mods[:, 4 * l + 0: 4 * l + 1]
            b1 = mods[:, 4 * l + 1: 4 * l + 2]
            g2 = mods[:, 4 * l + 2: 4 * l + 3]
            b2 = mods[:, 4 * l + 3: 4 * l + 4]
            xt = adain(x, g1, b1)
            xt = conv(xt, w1_ref[l], biases[:, 2 * l: 2 * l + 1], dilations[l])
            xt = adain(xt, g2, b2)
            xt = conv(xt, w2_ref[l], biases[:, 2 * l + 1: 2 * l + 2], 1)
            x = x + xt
        o_ref[0] = x.astype(o_ref.dtype)

    return kernel


# ----------------------------------------------------------------------------
# One-time parameter packing (hoisted out of the forward call path).
# ----------------------------------------------------------------------------
def prepack_params(params, *, channels, compute_dtype=jnp.bfloat16):
    C = channels

    def pack_conv(w):  # (C_out, C_in, K) -> (C_out, K*C_in); column block k = tap k
        co, ci, k = w.shape
        return jnp.transpose(w, (0, 2, 1)).reshape(co, k * ci)

    return {
        "w1": jnp.stack([pack_conv(p["w1"]) for p in params]).astype(compute_dtype),
        "w2": jnp.stack([pack_conv(p["w2"]) for p in params]).astype(compute_dtype),
        "bias": jnp.stack([b for p in params for b in (p["b1"], p["b2"])],
                          axis=1).astype(jnp.float32),                  # (C, 2L)
        "fc_w": jnp.stack([jnp.stack([p["fc1_w"], p["fc2_w"]]) for p in params]),  # (L,2,2C,S)
        "fc_b": jnp.stack([jnp.stack([p["fc1_b"], p["fc2_b"]]) for p in params]),  # (L,2,2C)
    }


def ada_res_block_pallas(x, style, packed, *, kernel_size, dilations,
                         compute_dtype=jnp.bfloat16):
    B, C, T = x.shape
    K = kernel_size
    L = len(dilations)

    # Style FC for every AdaNorm of every layer as ONE batched matmul, passed
    # lane-dense as (B, C, 4L) = [1+gamma1, beta1, 1+gamma2, beta2] per layer.
    h = jnp.einsum("bs,ljcs->bljc", style.astype(jnp.float32), packed["fc_w"],
                   precision=HI) + packed["fc_b"]                 # (B, L, 2, 2C)
    gamma = 1.0 + h[..., :C]                                      # (B, L, 2, C)
    beta = h[..., C:]
    mods = jnp.stack([gamma, beta], axis=3)                       # (B, L, 2, 2, C)
    mods = jnp.transpose(mods.reshape(B, 4 * L, C), (0, 2, 1))    # (B, C, 4L)

    kernel = _make_fused_kernel(C, T, K, tuple(dilations), compute_dtype)

    return pl.pallas_call(
        kernel,
        out_shape=jax.ShapeDtypeStruct((B, C, T), x.dtype),
        grid=(B,),
        in_specs=[
            pl.BlockSpec((1, C, T), lambda b: (b, 0, 0)),         # x (per-batch tile)
            pl.BlockSpec((1, C, 4 * L), lambda b: (b, 0, 0)),     # style modulations
            pl.BlockSpec((C, 2 * L), lambda b: (0, 0)),           # conv biases (resident)
            pl.BlockSpec((L, C, K * C), lambda b: (0, 0, 0)),     # packed convs1 weights
            pl.BlockSpec((L, C, K * C), lambda b: (0, 0, 0)),     # packed convs2 weights
        ],
        out_specs=pl.BlockSpec((1, C, T), lambda b: (b, 0, 0)),
        compiler_params=pltpu.CompilerParams(
            # Batch axis kept parallel so v7x's two TensorCores split it;
            # on v5e/v6e it is a plain sequential grid loop.
            dimension_semantics=("parallel",)),
        # TODO(synk): at production C/T, tile T (two-pass instance norm with a
        # (K-1)*max(dilation)//2 halo) and budget vmem_limit_bytes for v7x's
        # smaller (64 MiB) VMEM.
    )(x, mods, packed["bias"], packed["w1"], packed["w2"])


# ----------------------------------------------------------------------------
# Deterministic parameter init (shapes from AdaResBlock.__init__).
# ----------------------------------------------------------------------------
def init_params(key, *, channels, kernel_size, style_dim, dilations):
    params = []
    for i, _ in enumerate(dilations):
        ks = jax.random.split(jax.random.fold_in(key, i), 8)
        params.append({
            # Conv1d weight layout: (C_out, C_in, K)  (effective, weight_norm folded)
            "w1": 0.1 * jax.random.normal(ks[0], (channels, channels, kernel_size), jnp.float32),
            "b1": 0.1 * jax.random.normal(ks[1], (channels,), jnp.float32),
            "w2": 0.1 * jax.random.normal(ks[2], (channels, channels, kernel_size), jnp.float32),
            "b2": 0.1 * jax.random.normal(ks[3], (channels,), jnp.float32),
            # Linear(style_dim, 2*channels): weight (2C, S), bias (2C,)
            "fc1_w": 0.2 * jax.random.normal(ks[4], (2 * channels, style_dim), jnp.float32),
            "fc1_b": 0.1 * jax.random.normal(ks[5], (2 * channels,), jnp.float32),
            "fc2_w": 0.2 * jax.random.normal(ks[6], (2 * channels, style_dim), jnp.float32),
            "fc2_b": 0.1 * jax.random.normal(ks[7], (2 * channels,), jnp.float32),
        })
    return params


# ----------------------------------------------------------------------------
# Pure-JAX f32 reference (mirrors the PyTorch forward) for verification.
# ----------------------------------------------------------------------------
def ada_res_block_ref(x, style, params, *, kernel_size, dilations):
    B, C, T = x.shape
    K = kernel_size

    def adain(xv, fc_w, fc_b):
        h = jnp.einsum("bs,os->bo", style, fc_w, precision=HI) + fc_b[None, :]
        gamma = h[:, :C, None]
        beta = h[:, C:, None]
        mean = xv.mean(axis=-1, keepdims=True)
        var = ((xv - mean) ** 2).mean(axis=-1, keepdims=True)
        xn = (xv - mean) / jnp.sqrt(var + EPS)
        return (1.0 + gamma) * xn + beta

    def conv1d(xv, w, b, d):
        pad = (K - 1) * d // 2
        xp = jnp.pad(xv, ((0, 0), (0, 0), (pad, pad)))
        out = jnp.zeros_like(xv)
        for k in range(K):
            out = out + jnp.einsum("oi,bit->bot", w[:, :, k],
                                   xp[:, :, k * d:k * d + T], precision=HI)
        return out + b[None, :, None]

    for lp, d in zip(params, dilations):
        xt = adain(x, lp["fc1_w"], lp["fc1_b"])
        xt = conv1d(xt, lp["w1"], lp["b1"], d)
        xt = adain(xt, lp["fc2_w"], lp["fc2_b"])
        xt = conv1d(xt, lp["w2"], lp["b2"], 1)
        x = x + xt
    return x


if __name__ == "__main__":
    B, C, T = 2, 16, 128     # batch, channels, sequence length
    S = 8                    # style_dim
    K = 3                    # kernel_size
    dilations = (1, 3, 5)

    key = jax.random.PRNGKey(0)
    kx, ks, kp = jax.random.split(key, 3)
    x = jax.random.normal(kx, (B, C, T), jnp.float32)
    style = jax.random.normal(ks, (B, S), jnp.float32)
    params = init_params(kp, channels=C, kernel_size=K, style_dim=S,
                         dilations=dilations)

    ref = ada_res_block_ref(x, style, params, kernel_size=K, dilations=dilations)

    # 1) Tight logic check: f32 MXU operands vs. the PyTorch-mirroring reference.
    packed_f32 = prepack_params(params, channels=C, compute_dtype=jnp.float32)
    out_f32 = jax.block_until_ready(
        ada_res_block_pallas(x, style, packed_f32, kernel_size=K,
                             dilations=dilations, compute_dtype=jnp.float32))
    assert out_f32.shape == (B, C, T)
    err_f32 = float(jnp.max(jnp.abs(out_f32 - ref)))
    assert err_f32 <= 2e-3, err_f32

    # 2) Performance configuration: bf16 MXU operands, f32 accumulation.
    #    Loose precision-appropriate bound; exact logic is validated above.
    packed_bf16 = prepack_params(params, channels=C, compute_dtype=jnp.bfloat16)
    out_bf16 = jax.block_until_ready(
        ada_res_block_pallas(x, style, packed_bf16, kernel_size=K,
                             dilations=dilations, compute_dtype=jnp.bfloat16))
    scale = float(jnp.max(jnp.abs(ref)))
    err_bf16 = float(jnp.max(jnp.abs(out_bf16 - ref)))
    assert err_bf16 <= 5e-2 * max(scale, 1.0), (err_bf16, scale)

    print("KERNEL_OK")
</pallas_src>

<mosaic_0001>
module attributes {stable_mosaic.version = 11 : i64} {
  func.func @kernel(%arg0: i32, %arg1: memref<1x16x128xf32, #tpu.memory_space<vmem>>, %arg2: memref<1x16x12xf32, #tpu.memory_space<vmem>>, %arg3: memref<16x6xf32, #tpu.memory_space<vmem>>, %arg4: memref<3x16x48xf32, #tpu.memory_space<vmem>>, %arg5: memref<3x16x48xf32, #tpu.memory_space<vmem>>, %arg6: memref<1x16x128xf32, #tpu.memory_space<vmem>>) attributes {dimension_semantics = [#tpu.dimension_semantics<parallel>], iteration_bounds = array<i64: 2>, scalar_prefetch = 0 : i64, scratch_operands = 0 : i64, tpu.core_type = #tpu.core_type<tc>, window_params = [{transform_indices = @transform_0, window_bounds = array<i64: 1, 16, 128>}, {transform_indices = @transform_1, window_bounds = array<i64: 1, 16, 12>}, {pipeline_mode = #tpu.pipeline_mode<synchronous>, transform_indices = @transform_2, window_bounds = array<i64: 16, 6>}, {pipeline_mode = #tpu.pipeline_mode<synchronous>, transform_indices = @transform_3, window_bounds = array<i64: 3, 16, 48>}, {pipeline_mode = #tpu.pipeline_mode<synchronous>, transform_indices = @transform_4, window_bounds = array<i64: 3, 16, 48>}, {transform_indices = @transform_5, window_bounds = array<i64: 1, 16, 128>}]} {
    %c0 = arith.constant 0 : index
    %c0_0 = arith.constant 0 : index
    %c0_1 = arith.constant 0 : index
    %0 = vector.load %arg1[%c0, %c0_0, %c0_1] : memref<1x16x128xf32, #tpu.memory_space<vmem>>, vector<1x16x128xf32>
    %1 = vector.shape_cast %0 : vector<1x16x128xf32> to vector<16x128xf32>
    %c0_2 = arith.constant 0 : index
    %c0_3 = arith.constant 0 : index
    %c0_4 = arith.constant 0 : index
    %2 = vector.load %arg2[%c0_2, %c0_3, %c0_4] : memref<1x16x12xf32, #tpu.memory_space<vmem>>, vector<1x16x12xf32>
    %3 = vector.shape_cast %2 : vector<1x16x12xf32> to vector<16x12xf32>
    %c0_5 = arith.constant 0 : index
    %c0_6 = arith.constant 0 : index
    %4 = vector.load %arg3[%c0_5, %c0_6] : memref<16x6xf32, #tpu.memory_space<vmem>>, vector<16x6xf32>
    %5 = vector.extract_strided_slice %3 {offsets = [0, 0], sizes = [16, 1], strides = [1, 1]} : vector<16x12xf32> to vector<16x1xf32>
    %6 = vector.extract_strided_slice %3 {offsets = [0, 1], sizes = [16, 1], strides = [1, 1]} : vector<16x12xf32> to vector<16x1xf32>
    %7 = vector.extract_strided_slice %3 {offsets = [0, 2], sizes = [16, 1], strides = [1, 1]} : vector<16x12xf32> to vector<16x1xf32>
    %8 = vector.extract_strided_slice %3 {offsets = [0, 3], sizes = [16, 1], strides = [1, 1]} : vector<16x12xf32> to vector<16x1xf32>
    %cst = arith.constant dense<0.000000e+00> : vector<16xf32>
    %9 = vector.multi_reduction <add>, %1, %cst [1] : vector<16x128xf32> to vector<16xf32>
    %10 = vector.shape_cast %9 : vector<16xf32> to vector<16x1xf32>
    %cst_7 = arith.constant 7.812500e-03 : f32
    %11 = vector.broadcast %cst_7 : f32 to vector<16x1xf32>
    %12 = arith.mulf %10, %11 : vector<16x1xf32>
    %13 = arith.mulf %1, %1 : vector<16x128xf32>
    %cst_8 = arith.constant dense<0.000000e+00> : vector<16xf32>
    %14 = vector.multi_reduction <add>, %13, %cst_8 [1] : vector<16x128xf32> to vector<16xf32>
    %15 = vector.shape_cast %14 : vector<16xf32> to vector<16x1xf32>
    %cst_9 = arith.constant 7.812500e-03 : f32
    %16 = vector.broadcast %cst_9 : f32 to vector<16x1xf32>
    %17 = arith.mulf %15, %16 : vector<16x1xf32>
    %18 = arith.mulf %12, %12 : vector<16x1xf32>
    %19 = arith.subf %17, %18 : vector<16x1xf32>
    %cst_10 = arith.constant 0.000000e+00 : f32
    %20 = vector.broadcast %cst_10 : f32 to vector<16x1xf32>
    %21 = arith.maximumf %19, %20 : vector<16x1xf32>
    %22 = vector.broadcast %12 : vector<16x1xf32> to vector<16x128xf32>
    %23 = arith.subf %1, %22 : vector<16x128xf32>
    %cst_11 = arith.constant 9.99999974E-6 : f32
    %24 = vector.broadcast %cst_11 : f32 to vector<16x1xf32>
    %25 = arith.addf %21, %24 : vector<16x1xf32>
    %26 = math.rsqrt %25 : vector<16x1xf32>
    %27 = vector.broadcast %26 : vector<16x1xf32> to vector<16x128xf32>
    %28 = arith.mulf %23, %27 : vector<16x128xf32>
    %29 = vector.broadcast %5 : vector<16x1xf32> to vector<16x128xf32>
    %30 = arith.mulf %29, %28 : vector<16x128xf32>
    %31 = vector.broadcast %6 : vector<16x1xf32> to vector<16x128xf32>
    %32 = arith.addf %30, %31 : vector<16x128xf32>
    %c0_12 = arith.constant 0 : index
    %c0_13 = arith.constant 0 : index
    %c0_14 = arith.constant 0 : index
    %33 = vector.load %arg4[%c0_12, %c0_13, %c0_14] : memref<3x16x48xf32, #tpu.memory_space<vmem>>, vector<1x16x48xf32>
    %34 = vector.shape_cast %33 : vector<1x16x48xf32> to vector<16x48xf32>
    %35 = vector.extract_strided_slice %4 {offsets = [0, 0], sizes = [16, 1], strides = [1, 1]} : vector<16x6xf32> to vector<16x1xf32>
    %cst_15 = arith.constant 0.000000e+00 : f32
    %36 = vector.broadcast %cst_15 : f32 to vector<16x1xf32>
    %37 = tpu.concatenate %36, %32, %36 in 1 : vector<16x1xf32>, vector<16x128xf32>, vector<16x1xf32> -> vector<16x130xf32>
    %38 = vector.extract_strided_slice %37 {offsets = [0, 0], sizes = [16, 128], strides = [1, 1]} : vector<16x130xf32> to vector<16x128xf32>
    %39 = vector.extract_strided_slice %37 {offsets = [0, 1], sizes = [16, 128], strides = [1, 1]} : vector<16x130xf32> to vector<16x128xf32>
    %40 = vector.extract_strided_slice %37 {offsets = [0, 2], sizes = [16, 128], strides = [1, 1]} : vector<16x130xf32> to vector<16x128xf32>
    %41 = tpu.concatenate %38, %39, %40 in 0 : vector<16x128xf32>, vector<16x128xf32>, vector<16x128xf32> -> vector<48x128xf32>
    %cst_16 = arith.constant dense<0.000000e+00> : vector<16x128xf32>
    %42 = tpu.matmul %34, %41, %cst_16 {dimension_numbers = #tpu.dot_dimension_numbers<[1], [0], [0], [1], [0, 0, 1, 1], [], []>} : vector<16x48xf32>, vector<48x128xf32>, vector<16x128xf32> -> vector<16x128xf32>
    %43 = vector.broadcast %35 : vector<16x1xf32> to vector<16x128xf32>
    %44 = arith.addf %42, %43 : vector<16x128xf32>
    %cst_17 = arith.constant dense<0.000000e+00> : vector<16xf32>
    %45 = vector.multi_reduction <add>, %44, %cst_17 [1] : vector<16x128xf32> to vector<16xf32>
    %46 = vector.shape_cast %45 : vector<16xf32> to vector<16x1xf32>
    %cst_18 = arith.constant 7.812500e-03 : f32
    %47 = vector.broadcast %cst_18 : f32 to vector<16x1xf32>
    %48 = arith.mulf %46, %47 : vector<16x1xf32>
    %49 = arith.mulf %44, %44 : vector<16x128xf32>
    %cst_19 = arith.constant dense<0.000000e+00> : vector<16xf32>
    %50 = vector.multi_reduction <add>, %49, %cst_19 [1] : vector<16x128xf32> to vector<16xf32>
    %51 = vector.shape_cast %50 : vector<16xf32> to vector<16x1xf32>
    %cst_20 = arith.constant 7.812500e-03 : f32
    %52 = vector.broadcast %cst_20 : f32 to vector<16x1xf32>
    %53 = arith.mulf %51, %52 : vector<16x1xf32>
    %54 = arith.mulf %48, %48 : vector<16x1xf32>
    %55 = arith.subf %53, %54 : vector<16x1xf32>
    %cst_21 = arith.constant 0.000000e+00 : f32
    %56 = vector.broadcast %cst_21 : f32 to vector<16x1xf32>
    %57 = arith.maximumf %55, %56 : vector<16x1xf32>
    %58 = vector.broadcast %48 : vector<16x1xf32> to vector<16x128xf32>
    %59 = arith.subf %44, %58 : vector<16x128xf32>
    %cst_22 = arith.constant 9.99999974E-6 : f32
    %60 = vector.broadcast %cst_22 : f32 to vector<16x1xf32>
    %61 = arith.addf %57, %60 : vector<16x1xf32>
    %62 = math.rsqrt %61 : vector<16x1xf32>
    %63 = vector.broadcast %62 : vector<16x1xf32> to vector<16x128xf32>
    %64 = arith.mulf %59, %63 : vector<16x128xf32>
    %65 = vector.broadcast %7 : vector<16x1xf32> to vector<16x128xf32>
    %66 = arith.mulf %65, %64 : vector<16x128xf32>
    %67 = vector.broadcast %8 : vector<16x1xf32> to vector<16x128xf32>
    %68 = arith.addf %66, %67 : vector<16x128xf32>
    %c0_23 = arith.constant 0 : index
    %c0_24 = arith.constant 0 : index
    %c0_25 = arith.constant 0 : index
    %69 = vector.load %arg5[%c0_23, %c0_24, %c0_25] : memref<3x16x48xf32, #tpu.memory_space<vmem>>, vector<1x16x48xf32>
    %70 = vector.shape_cast %69 : vector<1x16x48xf32> to vector<16x48xf32>
    %71 = vector.extract_strided_slice %4 {offsets = [0, 1], sizes = [16, 1], strides = [1, 1]} : vector<16x6xf32> to vector<16x1xf32>
    %cst_26 = arith.constant 0.000000e+00 : f32
    %72 = vector.broadcast %cst_26 : f32 to vector<16x1xf32>
    %73 = tpu.concatenate %72, %68, %72 in 1 : vector<16x1xf32>, vector<16x128xf32>, vector<16x1xf32> -> vector<16x130xf32>
    %74 = vector.extract_strided_slice %73 {offsets = [0, 0], sizes = [16, 128], strides = [1, 1]} : vector<16x130xf32> to vector<16x128xf32>
    %75 = vector.extract_strided_slice %73 {offsets = [0, 1], sizes = [16, 128], strides = [1, 1]} : vector<16x130xf32> to vector<16x128xf32>
    %76 = vector.extract_strided_slice %73 {offsets = [0, 2], sizes = [16, 128], strides = [1, 1]} : vector<16x130xf32> to vector<16x128xf32>
    %77 = tpu.concatenate %74, %75, %76 in 0 : vector<16x128xf32>, vector<16x128xf32>, vector<16x128xf32> -> vector<48x128xf32>
    %cst_27 = arith.constant dense<0.000000e+00> : vector<16x128xf32>
    %78 = tpu.matmul %70, %77, %cst_27 {dimension_numbers = #tpu.dot_dimension_numbers<[1], [0], [0], [1], [0, 0, 1, 1], [], []>} : vector<16x48xf32>, vector<48x128xf32>, vector<16x128xf32> -> vector<16x128xf32>
    %79 = vector.broadcast %71 : vector<16x1xf32> to vector<16x128xf32>
    %80 = arith.addf %78, %79 : vector<16x128xf32>
    %81 = arith.addf %1, %80 : vector<16x128xf32>
    %82 = vector.extract_strided_slice %3 {offsets = [0, 4], sizes = [16, 1], strides = [1, 1]} : vector<16x12xf32> to vector<16x1xf32>
    %83 = vector.extract_strided_slice %3 {offsets = [0, 5], sizes = [16, 1], strides = [1, 1]} : vector<16x12xf32> to vector<16x1xf32>
    %84 = vector.extract_strided_slice %3 {offsets = [0, 6], sizes = [16, 1], strides = [1, 1]} : vector<16x12xf32> to vector<16x1xf32>
    %85 = vector.extract_strided_slice %3 {offsets = [0, 7], sizes = [16, 1], strides = [1, 1]} : vector<16x12xf32> to vector<16x1xf32>
    %cst_28 = arith.constant dense<0.000000e+00> : vector<16xf32>
    %86 = vector.multi_reduction <add>, %81, %cst_28 [1] : vector<16x128xf32> to vector<16xf32>
    %87 = vector.shape_cast %86 : vector<16xf32> to vector<16x1xf32>
    %cst_29 = arith.constant 7.812500e-03 : f32
    %88 = vector.broadcast %cst_29 : f32 to vector<16x1xf32>
    %89 = arith.mulf %87, %88 : vector<16x1xf32>
    %90 = arith.mulf %81, %81 : vector<16x128xf32>
    %cst_30 = arith.constant dense<0.000000e+00> : vector<16xf32>
    %91 = vector.multi_reduction <add>, %90, %cst_30 [1] : vector<16x128xf32> to vector<16xf32>
    %92 = vector.shape_cast %91 : vector<16xf32> to vector<16x1xf32>
    %cst_31 = arith.constant 7.812500e-03 : f32
    %93 = vector.broadcast %cst_31 : f32 to vector<16x1xf32>
    %94 = arith.mulf %92, %93 : vector<16x1xf32>
    %95 = arith.mulf %89, %89 : vector<16x1xf32>
    %96 = arith.subf %94, %95 : vector<16x1xf32>
    %cst_32 = arith.constant 0.000000e+00 : f32
    %97 = vector.broadcast %cst_32 : f32 to vector<16x1xf32>
    %98 = arith.maximumf %96, %97 : vector<16x1xf32>
    %99 = vector.broadcast %89 : vector<16x1xf32> to vector<16x128xf32>
    %100 = arith.subf %81, %99 : vector<16x128xf32>
    %cst_33 = arith.constant 9.99999974E-6 : f32
    %101 = vector.broadcast %cst_33 : f32 to vector<16x1xf32>
    %102 = arith.addf %98, %101 : vector<16x1xf32>
    %103 = math.rsqrt %102 : vector<16x1xf32>
    %104 = vector.broadcast %103 : vector<16x1xf32> to vector<16x128xf32>
    %105 = arith.mulf %100, %104 : vector<16x128xf32>
    %106 = vector.broadcast %82 : vector<16x1xf32> to vector<16x128xf32>
    %107 = arith.mulf %106, %105 : vector<16x128xf32>
    %108 = vector.broadcast %83 : vector<16x1xf32> to vector<16x128xf32>
    %109 = arith.addf %107, %108 : vector<16x128xf32>
    %c1 = arith.constant 1 : index
    %c0_34 = arith.constant 0 : index
    %c0_35 = arith.constant 0 : index
    %110 = vector.load %arg4[%c1, %c0_34, %c0_35] : memref<3x16x48xf32, #tpu.memory_space<vmem>>, vector<1x16x48xf32>
    %111 = vector.shape_cast %110 : vector<1x16x48xf32> to vector<16x48xf32>
    %112 = vector.extract_strided_slice %4 {offsets = [0, 2], sizes = [16, 1], strides = [1, 1]} : vector<16x6xf32> to vector<16x1xf32>
    %cst_36 = arith.constant 0.000000e+00 : f32
    %113 = vector.broadcast %cst_36 : f32 to vector<16x3xf32>
    %114 = tpu.concatenate %113, %109, %113 in 1 : vector<16x3xf32>, vector<16x128xf32>, vector<16x3xf32> -> vector<16x134xf32>
    %115 = vector.extract_strided_slice %114 {offsets = [0, 0], sizes = [16, 128], strides = [1, 1]} : vector<16x134xf32> to vector<16x128xf32>
    %116 = vector.extract_strided_slice %114 {offsets = [0, 3], sizes = [16, 128], strides = [1, 1]} : vector<16x134xf32> to vector<16x128xf32>
    %117 = vector.extract_strided_slice %114 {offsets = [0, 6], sizes = [16, 128], strides = [1, 1]} : vector<16x134xf32> to vector<16x128xf32>
    %118 = tpu.concatenate %115, %116, %117 in 0 : vector<16x128xf32>, vector<16x128xf32>, vector<16x128xf32> -> vector<48x128xf32>
    %cst_37 = arith.constant dense<0.000000e+00> : vector<16x128xf32>
    %119 = tpu.matmul %111, %118, %cst_37 {dimension_numbers = #tpu.dot_dimension_numbers<[1], [0], [0], [1], [0, 0, 1, 1], [], []>} : vector<16x48xf32>, vector<48x128xf32>, vector<16x128xf32> -> vector<16x128xf32>
    %120 = vector.broadcast %112 : vector<16x1xf32> to vector<16x128xf32>
    %121 = arith.addf %119, %120 : vector<16x128xf32>
    %cst_38 = arith.constant dense<0.000000e+00> : vector<16xf32>
    %122 = vector.multi_reduction <add>, %121, %cst_38 [1] : vector<16x128xf32> to vector<16xf32>
    %123 = vector.shape_cast %122 : vector<16xf32> to vector<16x1xf32>
    %cst_39 = arith.constant 7.812500e-03 : f32
    %124 = vector.broadcast %cst_39 : f32 to vector<16x1xf32>
    %125 = arith.mulf %123, %124 : vector<16x1xf32>
    %126 = arith.mulf %121, %121 : vector<16x128xf32>
    %cst_40 = arith.constant dense<0.000000e+00> : vector<16xf32>
    %127 = vector.multi_reduction <add>, %126, %cst_40 [1] : vector<16x128xf32> to vector<16xf32>
    %128 = vector.shape_cast %127 : vector<16xf32> to vector<16x1xf32>
    %cst_41 = arith.constant 7.812500e-03 : f32
    %129 = vector.broadcast %cst_41 : f32 to vector<16x1xf32>
    %130 = arith.mulf %128, %129 : vector<16x1xf32>
    %131 = arith.mulf %125, %125 : vector<16x1xf32>
    %132 = arith.subf %130, %131 : vector<16x1xf32>
    %cst_42 = arith.constant 0.000000e+00 : f32
    %133 = vector.broadcast %cst_42 : f32 to vector<16x1xf32>
    %134 = arith.maximumf %132, %133 : vector<16x1xf32>
    %135 = vector.broadcast %125 : vector<16x1xf32> to vector<16x128xf32>
    %136 = arith.subf %121, %135 : vector<16x128xf32>
    %cst_43 = arith.constant 9.99999974E-6 : f32
    %137 = vector.broadcast %cst_43 : f32 to vector<16x1xf32>
    %138 = arith.addf %134, %137 : vector<16x1xf32>
    %139 = math.rsqrt %138 : vector<16x1xf32>
    %140 = vector.broadcast %139 : vector<16x1xf32> to vector<16x128xf32>
    %141 = arith.mulf %136, %140 : vector<16x128xf32>
    %142 = vector.broadcast %84 : vector<16x1xf32> to vector<16x128xf32>
    %143 = arith.mulf %142, %141 : vector<16x128xf32>
    %144 = vector.broadcast %85 : vector<16x1xf32> to vector<16x128xf32>
    %145 = arith.addf %143, %144 : vector<16x128xf32>
    %c1_44 = arith.constant 1 : index
    %c0_45 = arith.constant 0 : index
    %c0_46 = arith.constant 0 : index
    %146 = vector.load %arg5[%c1_44, %c0_45, %c0_46] : memref<3x16x48xf32, #tpu.memory_space<vmem>>, vector<1x16x48xf32>
    %147 = vector.shape_cast %146 : vector<1x16x48xf32> to vector<16x48xf32>
    %148 = vector.extract_strided_slice %4 {offsets = [0, 3], sizes = [16, 1], strides = [1, 1]} : vector<16x6xf32> to vector<16x1xf32>
    %cst_47 = arith.constant 0.000000e+00 : f32
    %149 = vector.broadcast %cst_47 : f32 to vector<16x1xf32>
    %150 = tpu.concatenate %149, %145, %149 in 1 : vector<16x1xf32>, vector<16x128xf32>, vector<16x1xf32> -> vector<16x130xf32>
    %151 = vector.extract_strided_slice %150 {offsets = [0, 0], sizes = [16, 128], strides = [1, 1]} : vector<16x130xf32> to vector<16x128xf32>
    %152 = vector.extract_strided_slice %150 {offsets = [0, 1], sizes = [16, 128], strides = [1, 1]} : vector<16x130xf32> to vector<16x128xf32>
    %153 = vector.extract_strided_slice %150 {offsets = [0, 2], sizes = [16, 128], strides = [1, 1]} : vector<16x130xf32> to vector<16x128xf32>
    %154 = tpu.concatenate %151, %152, %153 in 0 : vector<16x128xf32>, vector<16x128xf32>, vector<16x128xf32> -> vector<48x128xf32>
    %cst_48 = arith.constant dense<0.000000e+00> : vector<16x128xf32>
    %155 = tpu.matmul %147, %154, %cst_48 {dimension_numbers = #tpu.dot_dimension_numbers<[1], [0], [0], [1], [0, 0, 1, 1], [], []>} : vector<16x48xf32>, vector<48x128xf32>, vector<16x128xf32> -> vector<16x128xf32>
    %156 = vector.broadcast %148 : vector<16x1xf32> to vector<16x128xf32>
    %157 = arith.addf %155, %156 : vector<16x128xf32>
    %158 = arith.addf %81, %157 : vector<16x128xf32>
    %159 = vector.extract_strided_slice %3 {offsets = [0, 8], sizes = [16, 1], strides = [1, 1]} : vector<16x12xf32> to vector<16x1xf32>
    %160 = vector.extract_strided_slice %3 {offsets = [0, 9], sizes = [16, 1], strides = [1, 1]} : vector<16x12xf32> to vector<16x1xf32>
    %161 = vector.extract_strided_slice %3 {offsets = [0, 10], sizes = [16, 1], strides = [1, 1]} : vector<16x12xf32> to vector<16x1xf32>
    %162 = vector.extract_strided_slice %3 {offsets = [0, 11], sizes = [16, 1], strides = [1, 1]} : vector<16x12xf32> to vector<16x1xf32>
    %cst_49 = arith.constant dense<0.000000e+00> : vector<16xf32>
    %163 = vector.multi_reduction <add>, %158, %cst_49 [1] : vector<16x128xf32> to vector<16xf32>
    %164 = vector.shape_cast %163 : vector<16xf32> to vector<16x1xf32>
    %cst_50 = arith.constant 7.812500e-03 : f32
    %165 = vector.broadcast %cst_50 : f32 to vector<16x1xf32>
    %166 = arith.mulf %164, %165 : vector<16x1xf32>
    %167 = arith.mulf %158, %158 : vector<16x128xf32>
    %cst_51 = arith.constant dense<0.000000e+00> : vector<16xf32>
    %168 = vector.multi_reduction <add>, %167, %cst_51 [1] : vector<16x128xf32> to vector<16xf32>
    %169 = vector.shape_cast %168 : vector<16xf32> to vector<16x1xf32>
    %cst_52 = arith.constant 7.812500e-03 : f32
    %170 = vector.broadcast %cst_52 : f32 to vector<16x1xf32>
    %171 = arith.mulf %169, %170 : vector<16x1xf32>
    %172 = arith.mulf %166, %166 : vector<16x1xf32>
    %173 = arith.subf %171, %172 : vector<16x1xf32>
    %cst_53 = arith.constant 0.000000e+00 : f32
    %174 = vector.broadcast %cst_53 : f32 to vector<16x1xf32>
    %175 = arith.maximumf %173, %174 : vector<16x1xf32>
    %176 = vector.broadcast %166 : vector<16x1xf32> to vector<16x128xf32>
    %177 = arith.subf %158, %176 : vector<16x128xf32>
    %cst_54 = arith.constant 9.99999974E-6 : f32
    %178 = vector.broadcast %cst_54 : f32 to vector<16x1xf32>
    %179 = arith.addf %175, %178 : vector<16x1xf32>
    %180 = math.rsqrt %179 : vector<16x1xf32>
    %181 = vector.broadcast %180 : vector<16x1xf32> to vector<16x128xf32>
    %182 = arith.mulf %177, %181 : vector<16x128xf32>
    %183 = vector.broadcast %159 : vector<16x1xf32> to vector<16x128xf32>
    %184 = arith.mulf %183, %182 : vector<16x128xf32>
    %185 = vector.broadcast %160 : vector<16x1xf32> to vector<16x128xf32>
    %186 = arith.addf %184, %185 : vector<16x128xf32>
    %c2 = arith.constant 2 : index
    %c0_55 = arith.constant 0 : index
    %c0_56 = arith.constant 0 : index
    %187 = vector.load %arg4[%c2, %c0_55, %c0_56] : memref<3x16x48xf32, #tpu.memory_space<vmem>>, vector<1x16x48xf32>
    %188 = vector.shape_cast %187 : vector<1x16x48xf32> to vector<16x48xf32>
    %189 = vector.extract_strided_slice %4 {offsets = [0, 4], sizes = [16, 1], strides = [1, 1]} : vector<16x6xf32> to vector<16x1xf32>
    %cst_57 = arith.constant 0.000000e+00 : f32
    %190 = vector.broadcast %cst_57 : f32 to vector<16x5xf32>
    %191 = tpu.concatenate %190, %186, %190 in 1 : vector<16x5xf32>, vector<16x128xf32>, vector<16x5xf32> -> vector<16x138xf32>
    %192 = vector.extract_strided_slice %191 {offsets = [0, 0], sizes = [16, 128], strides = [1, 1]} : vector<16x138xf32> to vector<16x128xf32>
    %193 = vector.extract_strided_slice %191 {offsets = [0, 5], sizes = [16, 128], strides = [1, 1]} : vector<16x138xf32> to vector<16x128xf32>
    %194 = vector.extract_strided_slice %191 {offsets = [0, 10], sizes = [16, 128], strides = [1, 1]} : vector<16x138xf32> to vector<16x128xf32>
    %195 = tpu.concatenate %192, %193, %194 in 0 : vector<16x128xf32>, vector<16x128xf32>, vector<16x128xf32> -> vector<48x128xf32>
    %cst_58 = arith.constant dense<0.000000e+00> : vector<16x128xf32>
    %196 = tpu.matmul %188, %195, %cst_58 {dimension_numbers = #tpu.dot_dimension_numbers<[1], [0], [0], [1], [0, 0, 1, 1], [], []>} : vector<16x48xf32>, vector<48x128xf32>, vector<16x128xf32> -> vector<16x128xf32>
    %197 = vector.broadcast %189 : vector<16x1xf32> to vector<16x128xf32>
    %198 = arith.addf %196, %197 : vector<16x128xf32>
    %cst_59 = arith.constant dense<0.000000e+00> : vector<16xf32>
    %199 = vector.multi_reduction <add>, %198, %cst_59 [1] : vector<16x128xf32> to vector<16xf32>
    %200 = vector.shape_cast %199 : vector<16xf32> to vector<16x1xf32>
    %cst_60 = arith.constant 7.812500e-03 : f32
    %201 = vector.broadcast %cst_60 : f32 to vector<16x1xf32>
    %202 = arith.mulf %200, %201 : vector<16x1xf32>
    %203 = arith.mulf %198, %198 : vector<16x128xf32>
    %cst_61 = arith.constant dense<0.000000e+00> : vector<16xf32>
    %204 = vector.multi_reduction <add>, %203, %cst_61 [1] : vector<16x128xf32> to vector<16xf32>
    %205 = vector.shape_cast %204 : vector<16xf32> to vector<16x1xf32>
    %cst_62 = arith.constant 7.812500e-03 : f32
    %206 = vector.broadcast %cst_62 : f32 to vector<16x1xf32>
    %207 = arith.mulf %205, %206 : vector<16x1xf32>
    %208 = arith.mulf %202, %202 : vector<16x1xf32>
    %209 = arith.subf %207, %208 : vector<16x1xf32>
    %cst_63 = arith.constant 0.000000e+00 : f32
    %210 = vector.broadcast %cst_63 : f32 to vector<16x1xf32>
    %211 = arith.maximumf %209, %210 : vector<16x1xf32>
    %212 = vector.broadcast %202 : vector<16x1xf32> to vector<16x128xf32>
    %213 = arith.subf %198, %212 : vector<16x128xf32>
    %cst_64 = arith.constant 9.99999974E-6 : f32
    %214 = vector.broadcast %cst_64 : f32 to vector<16x1xf32>
    %215 = arith.addf %211, %214 : vector<16x1xf32>
    %216 = math.rsqrt %215 : vector<16x1xf32>
    %217 = vector.broadcast %216 : vector<16x1xf32> to vector<16x128xf32>
    %218 = arith.mulf %213, %217 : vector<16x128xf32>
    %219 = vector.broadcast %161 : vector<16x1xf32> to vector<16x128xf32>
    %220 = arith.mulf %219, %218 : vector<16x128xf32>
    %221 = vector.broadcast %162 : vector<16x1xf32> to vector<16x128xf32>
    %222 = arith.addf %220, %221 : vector<16x128xf32>
    %c2_65 = arith.constant 2 : index
    %c0_66 = arith.constant 0 : index
    %c0_67 = arith.constant 0 : index
    %223 = vector.load %arg5[%c2_65, %c0_66, %c0_67] : memref<3x16x48xf32, #tpu.memory_space<vmem>>, vector<1x16x48xf32>
    %224 = vector.shape_cast %223 : vector<1x16x48xf32> to vector<16x48xf32>
    %225 = vector.extract_strided_slice %4 {offsets = [0, 5], sizes = [16, 1], strides = [1, 1]} : vector<16x6xf32> to vector<16x1xf32>
    %cst_68 = arith.constant 0.000000e+00 : f32
    %226 = vector.broadcast %cst_68 : f32 to vector<16x1xf32>
    %227 = tpu.concatenate %226, %222, %226 in 1 : vector<16x1xf32>, vector<16x128xf32>, vector<16x1xf32> -> vector<16x130xf32>
    %228 = vector.extract_strided_slice %227 {offsets = [0, 0], sizes = [16, 128], strides = [1, 1]} : vector<16x130xf32> to vector<16x128xf32>
    %229 = vector.extract_strided_slice %227 {offsets = [0, 1], sizes = [16, 128], strides = [1, 1]} : vector<16x130xf32> to vector<16x128xf32>
    %230 = vector.extract_strided_slice %227 {offsets = [0, 2], sizes = [16, 128], strides = [1, 1]} : vector<16x130xf32> to vector<16x128xf32>
    %231 = tpu.concatenate %228, %229, %230 in 0 : vector<16x128xf32>, vector<16x128xf32>, vector<16x128xf32> -> vector<48x128xf32>
    %cst_69 = arith.constant dense<0.000000e+00> : vector<16x128xf32>
    %232 = tpu.matmul %224, %231, %cst_69 {dimension_numbers = #tpu.dot_dimension_numbers<[1], [0], [0], [1], [0, 0, 1, 1], [], []>} : vector<16x48xf32>, vector<48x128xf32>, vector<16x128xf32> -> vector<16x128xf32>
    %233 = vector.broadcast %225 : vector<16x1xf32> to vector<16x128xf32>
    %234 = arith.addf %232, %233 : vector<16x128xf32>
    %235 = arith.addf %158, %234 : vector<16x128xf32>
    %c0_70 = arith.constant 0 : index
    %c0_71 = arith.constant 0 : index
    %c0_72 = arith.constant 0 : index
    %236 = vector.load %arg6[%c0_70, %c0_71, %c0_72] : memref<1x16x128xf32, #tpu.memory_space<vmem>>, vector<1x16x128xf32>
    %237 = vector.shape_cast %236 : vector<1x16x128xf32> to vector<16x128xf32>
    %238 = vector.shape_cast %235 : vector<16x128xf32> to vector<1x16x128xf32>
    tpu.vector_store %arg6[%c0_70, %c0_71, %c0_72], %238 {strides = array<i32>} : memref<1x16x128xf32, #tpu.memory_space<vmem>>, vector<1x16x128xf32>,
    return
  }
  func.func @transform_0(%arg0: i32) -> (i32, i32, i32) {
    %c0_i32 = arith.constant 0 : i32
    %c0_i32_0 = arith.constant 0 : i32
    %c0_i32_1 = arith.constant 0 : i32
    return %arg0, %c0_i32, %c0_i32_0 : i32, i32, i32
  }
  func.func @transform_1(%arg0: i32) -> (i32, i32, i32) {
    %c0_i32 = arith.constant 0 : i32
    %c0_i32_0 = arith.constant 0 : i32
    %c0_i32_1 = arith.constant 0 : i32
    return %arg0, %c0_i32, %c0_i32_0 : i32, i32, i32
  }
  func.func @transform_2(%arg0: i32) -> (i32, i32) {
    %c0_i32 = arith.constant 0 : i32
    %c0_i32_0 = arith.constant 0 : i32
    %c0_i32_1 = arith.constant 0 : i32
    return %c0_i32, %c0_i32_0 : i32, i32
  }
  func.func @transform_3(%arg0: i32) -> (i32, i32, i32) {
    %c0_i32 = arith.constant 0 : i32
    %c0_i32_0 = arith.constant 0 : i32
    %c0_i32_1 = arith.constant 0 : i32
    %c0_i32_2 = arith.constant 0 : i32
    return %c0_i32, %c0_i32_0, %c0_i32_1 : i32, i32, i32
  }
  func.func @transform_4(%arg0: i32) -> (i32, i32, i32) {
    %c0_i32 = arith.constant 0 : i32
    %c0_i32_0 = arith.constant 0 : i32
    %c0_i32_1 = arith.constant 0 : i32
    %c0_i32_2 = arith.constant 0 : i32
    return %c0_i32, %c0_i32_0, %c0_i32_1 : i32, i32, i32
  }
  func.func @transform_5(%arg0: i32) -> (i32, i32, i32) {
    %c0_i32 = arith.constant 0 : i32
    %c0_i32_0 = arith.constant 0 : i32
    %c0_i32_1 = arith.constant 0 : i32
    return %arg0, %c0_i32, %c0_i32_0 : i32, i32, i32
  }
}

</mosaic_0001>

<llo_original>
// kernel: tpu_custom_call.1
$region0: #{tpu_custom_call.1}
  #allocation0 [shape = 'u32[]', space=smem, size = 0x4, offset = 0x4, fixed_abs, tag = 'smem constant byte address 0x4 - core index']
  #allocation1 [shape = 'u32[72,128]{1,0:T(1,128)}', space=vmem, size = 0x9000, scoped, tag = 'internal scratch']
  %s0 = inlined_call_operand.hbm [shape: f32[2,16,128], index: 0, kind: input, shape index: {}]
  %s1 = inlined_call_operand.vmem [shape: f32[2,16,12], index: 1, kind: input, shape index: {}]
  %s2 = inlined_call_operand.vmem [shape: f32[16,6], index: 2, kind: input, shape index: {}]
  %s3 = inlined_call_operand.vmem [shape: f32[3,16,48], index: 3, kind: input, shape index: {}]
  %s4 = inlined_call_operand.hbm [shape: f32[3,16,48], index: 4, kind: input, shape index: {}]
  %s5 = inlined_call_operand.hbm [shape: f32[2,16,128], index: 5, kind: output, shape index: {}]
  %s6 = sld [smem:[#allocation0]]
  $region61: #{tpu_custom_call.1} parent=0
    _
  %s8 = ssub.s32 1, %s6
  %s9 = scalar_select 0, %s8, %s6
  $region1: #{tpu_custom_call.1} parent=0
    #allocation2 [shape = 'u8[16384]{0}', space=vmem, size = 0x4000, scoped, tag = 'input window, operand 0']
    #allocation3 [shape = 's32[2]{0}', space=sflag, size = 0x8, scoped, tag = 'scoped memory for tpu_custom_call.1']
    #allocation4 [shape = 's32[2]{0}', space=sflag, size = 0x8, scoped, tag = 'scoped memory for tpu_custom_call.1']
    #allocation5 [shape = 'u8[24576]{0}', space=vmem, size = 0x6000, scoped, tag = 'input window, operand 4, single buffered']
    #allocation6 [shape = 's32[1]{0}', space=sflag, size = 0x4, scoped, tag = 'scoped memory for tpu_custom_call.1']
    #allocation7 [shape = 'u8[16384]{0}', space=vmem, size = 0x4000, scoped, tag = 'output window, operand 0']
    %10 = vsyncpa [#allocation3], 0
    %s11 = scalar_lea.sflag [#allocation3], 1
    %12 = vsyncpa %s11, 0
    %13 = vsyncpa [#allocation6], 0
    %14 = vsyncpa [#allocation4], 0
    %s15 = scalar_lea.sflag [#allocation4], 1
    %16 = vsyncpa %s15, 0
    loop: start=0, step=1, limit=4
    $region2: #{tpu_custom_call.1} parent=1 // loop_pre_header
      _
    $region3: #{tpu_custom_call.1} parent=1 // loop_header
      %s18 = sphi 0, %s22
      %p19 = scmp.ge.s32.totalorder %s18, 4
      %s28 = sphi 0, %s30
      %s31 = sphi 0, %s28
      %s32 = sphi 0, %s31
      %s48 = sphi 0, %s32
      %s54 = sphi 0, %s56
      %s57 = sphi 0, %s54
      %s58 = sphi 0, %s57
      %s74 = sphi 0, %s58
      %s78 = sphi 0, %s78
      %s80 = sphi 0, %s78
      %s81 = sphi 0, %s80
      %s95 = sphi 0, %s81
      %s99 = sphi 0, %s99
      %s101 = sphi 0, %s99
      %s102 = sphi 0, %s101
      %s116 = sphi 0, %s102
      %s120 = sphi 0, %s120
      %s122 = sphi 0, %s120
      %s123 = sphi 0, %s122
      %s137 = sphi 0, %s123
      %s143 = sphi 0, %s145
      %s146 = sphi 0, %s143
      %s147 = sphi 0, %s146
      %s163 = sphi 0, %s147
    $region4: #{tpu_custom_call.1} parent=1 // loop_header_branch
      %21 = sbr.rel (%p19) target = $region8
    $region5: #{tpu_custom_call.1} parent=1 // loop_body
      %s23 = ssub.s32 %s18, 1
      %s24 = ssub.s32 %s18, 2
      %s25 = sadd.s32 %s18, 1
      %s26 = ssub.s32 %s18, %s25
      %p27 = scmp.eq.s32.totalorder %s26, 0
      %s29 = sadd.s32 %s28, 1
      %s30 = scalar_select %p27, %s28, %s29
      %p33 = pneg %p27
      %p34 = scmp.eq.s32.totalorder %s18, 1
      %p35 = por %p33, %p34
      %p36 = scmp.ne.s32.totalorder %s28, %s31
      %p37 = scmp.eq.s32.totalorder %s18, 0
      %p38 = por %p36, %p37
      %p39 = scmp.ne.s32.totalorder %s28, %s31
      %p40 = scmp.eq.s32.totalorder %s23, 1
      %p41 = por %p39, %p40
      %p42 = scmp.ne.s32.totalorder %s31, %s32
      %p43 = scmp.eq.s32.totalorder %s23, 0
      %p44 = por %p42, %p43
      %p45 = scmp.ne.s32.totalorder %s31, %s32
      %p46 = scmp.eq.s32.totalorder %s24, 1
      %p47 = por %p45, %p46
      %p49 = scmp.ne.s32.totalorder %s32, %s48
      %p50 = scmp.eq.s32.totalorder %s24, 0
      %p51 = por %p49, %p50
      %s52 = ssub.s32 %s18, %s25
      %p53 = scmp.eq.s32.totalorder %s52, 0
      %s55 = sadd.s32 %s54, 1
      %s56 = scalar_select %p53, %s54, %s55
      %p59 = pneg %p53
      %p60 = scmp.eq.s32.totalorder %s18, 1
      %p61 = por %p59, %p60
      %p62 = scmp.ne.s32.totalorder %s54, %s57
      %p63 = scmp.eq.s32.totalorder %s18, 0
      %p64 = por %p62, %p63
      %p65 = scmp.ne.s32.totalorder %s54, %s57
      %p66 = scmp.eq.s32.totalorder %s23, 1
      %p67 = por %p65, %p66
      %p68 = scmp.ne.s32.totalorder %s57, %s58
      %p69 = scmp.eq.s32.totalorder %s23, 0
      %p70 = por %p68, %p69
      %p71 = scmp.ne.s32.totalorder %s57, %s58
      %p72 = scmp.eq.s32.totalorder %s24, 1
      %p73 = por %p71, %p72
      %p75 = scmp.ne.s32.totalorder %s58, %s74
      %p76 = scmp.eq.s32.totalorder %s24, 0
      %p77 = por %p75, %p76
      %s79 = sadd.s32 %s78, 1
      %p82 = scmp.eq.s32.totalorder %s18, 1
      %p83 = scmp.ne.s32.totalorder %s78, %s80
      %p84 = scmp.eq.s32.totalorder %s18, 0
      %p85 = por %p83, %p84
      %p86 = scmp.ne.s32.totalorder %s78, %s80
      %p87 = scmp.eq.s32.totalorder %s23, 1
      %p88 = por %p86, %p87
      %p89 = scmp.ne.s32.totalorder %s80, %s81
      %p90 = scmp.eq.s32.totalorder %s23, 0
      %p91 = por %p89, %p90
      %p92 = scmp.ne.s32.totalorder %s80, %s81
      %p93 = scmp.eq.s32.totalorder %s24, 1
      %p94 = por %p92, %p93
      %p96 = scmp.ne.s32.totalorder %s81, %s95
      %p97 = scmp.eq.s32.totalorder %s24, 0
      %p98 = por %p96, %p97
      %s100 = sadd.s32 %s99, 1
      %p103 = scmp.eq.s32.totalorder %s18, 1
      %p104 = scmp.ne.s32.totalorder %s99, %s101
      %p105 = scmp.eq.s32.totalorder %s18, 0
      %p106 = por %p104, %p105
      %p107 = scmp.ne.s32.totalorder %s99, %s101
      %p108 = scmp.eq.s32.totalorder %s23, 1
      %p109 = por %p107, %p108
      %p110 = scmp.ne.s32.totalorder %s101, %s102
      %p111 = scmp.eq.s32.totalorder %s23, 0
      %p112 = por %p110, %p111
      %p113 = scmp.ne.s32.totalorder %s101, %s102
      %p114 = scmp.eq.s32.totalorder %s24, 1
      %p115 = por %p113, %p114
      %p117 = scmp.ne.s32.totalorder %s102, %s116
      %p118 = scmp.eq.s32.totalorder %s24, 0
      %p119 = por %p117, %p118
      %s121 = sadd.s32 %s120, 1
      %p124 = scmp.eq.s32.totalorder %s18, 1
      %p125 = scmp.ne.s32.totalorder %s120, %s122
      %p126 = scmp.eq.s32.totalorder %s18, 0
      %p127 = por %p125, %p126
      %p128 = scmp.ne.s32.totalorder %s120, %s122
      %p129 = scmp.eq.s32.totalorder %s23, 1
      %p130 = por %p128, %p129
      %p131 = scmp.ne.s32.totalorder %s122, %s123
      %p132 = scmp.eq.s32.totalorder %s23, 0
      %p133 = por %p131, %p132
      %p134 = scmp.ne.s32.totalorder %s122, %s123
      %p135 = scmp.eq.s32.totalorder %s24, 1
      %p136 = por %p134, %p135
      %p138 = scmp.ne.s32.totalorder %s123, %s137
      %p139 = scmp.eq.s32.totalorder %s24, 0
      %p140 = por %p138, %p139
      %s141 = ssub.s32 %s18, %s25
      %p142 = scmp.eq.s32.totalorder %s141, 0
      %s144 = sadd.s32 %s143, 1
      %s145 = scalar_select %p142, %s143, %s144
      %p148 = pneg %p142
      %p149 = scmp.eq.s32.totalorder %s18, 1
      %p150 = por %p148, %p149
      %p151 = scmp.ne.s32.totalorder %s143, %s146
      %p152 = scmp.eq.s32.totalorder %s18, 0
      %p153 = por %p151, %p152
      %p154 = scmp.ne.s32.totalorder %s143, %s146
      %p155 = scmp.eq.s32.totalorder %s23, 1
      %p156 = por %p154, %p155
      %p157 = scmp.ne.s32.totalorder %s146, %s147
      %p158 = scmp.eq.s32.totalorder %s23, 0
      %p159 = por %p157, %p158
      %p160 = scmp.ne.s32.totalorder %s146, %s147
      %p161 = scmp.eq.s32.totalorder %s24, 1
      %p162 = por %p160, %p161
      %p164 = scmp.ne.s32.totalorder %s147, %s163
      %p165 = scmp.eq.s32.totalorder %s24, 0
      %p166 = por %p164, %p165
      %p167 = scmp.le.s32.totalorder 1, %s18
      %p168 = scmp.lt.s32.totalorder %s18, 3
      %p169 = pnand %p167, %p168
      %p170 = pneg %p169
      // Predicated region
      $region9: #{tpu_custom_call.1} parent=5 // pred_check
        _
      $region10: #{tpu_custom_call.1} parent=5 // pred_check_branch
        %172 = sbr.rel (%p169) target = $region12
      $region11: #{tpu_custom_call.1} parent=5 // pred_region
        %s173 = ssub.s32 %s18, 1
        // Predicated region
        $region13: #{tpu_custom_call.1} parent=11 // pred_check
          %p174 = pneg %p91
        $region14: #{tpu_custom_call.1} parent=11 // pred_check_branch
          %176 = sbr.rel (%p174) target = $region16
        $region15: #{tpu_custom_call.1} parent=11 // pred_region
          _
        $region16: #{tpu_custom_call.1} parent=11 // pred_fallthru
          _
        // Predicated region
        $region17: #{tpu_custom_call.1} parent=11 // pred_check
          %p177 = pneg %p112
        $region18: #{tpu_custom_call.1} parent=11 // pred_check_branch
          %179 = sbr.rel (%p177) target = $region20
        $region19: #{tpu_custom_call.1} parent=11 // pred_region
          _
        $region20: #{tpu_custom_call.1} parent=11 // pred_fallthru
          _
        // Predicated region
        $region21: #{tpu_custom_call.1} parent=11 // pred_check
          %p180 = pneg %p133
        $region22: #{tpu_custom_call.1} parent=11 // pred_check_branch
          %182 = sbr.rel (%p180) target = $region24
        $region23: #{tpu_custom_call.1} parent=11 // pred_region
          %184 = vsyncadd [#allocation6], 0
          %s185 = sshll.u32 %s4, 4
          %s186 = int_to_ptr.hbm [resolvable:$true] %s185
          %s187 = sshll.u32 [#allocation5], 4
          %s188 = int_to_ptr.vmem [resolvable:$true] %s187
          %193 = dma.hbm_to_vmem [thread:$0]  %s186, 768, %s188, [#allocation6], 128, 128, 8
        $region24: #{tpu_custom_call.1} parent=11 // pred_fallthru
          _
      $region12: #{tpu_custom_call.1} parent=5 // pred_fallthru
        _
      %p194 = scmp.lt.s32.totalorder %s18, 2
      // Predicated region
      $region25: #{tpu_custom_call.1} parent=5 // pred_check
        %p195 = pneg %p194
      $region26: #{tpu_custom_call.1} parent=5 // pred_check_branch
        %197 = sbr.rel (%p195) target = $region28
      $region27: #{tpu_custom_call.1} parent=5 // pred_region
        // Predicated region
        $region29: #{tpu_custom_call.1} parent=27 // pred_check
          %p198 = pneg %p38
        $region30: #{tpu_custom_call.1} parent=27 // pred_check_branch
          %200 = sbr.rel (%p198) target = $region32
        $region31: #{tpu_custom_call.1} parent=27 // pred_region
          %s201 = sand.u32 %s28, 1
          %s202 = scalar_lea.sflag [#allocation3], %s201
          %s203 = sand.u32 %s28, 1
          %s204 = smul.addr %s203, 16
          %s205 = scalar_lea.vmem [#allocation2], %s204
          %207 = vsyncadd %s202, 0
          %s208 = smul.addr %s18, 2
          %s209 = smul.addr %s208, 8
          %s210 = scalar_lea.hbm %s0, %s209
          %s211 = sshll.u32 %s210, 4
          %s212 = int_to_ptr.hbm [resolvable:$true] %s211
          %s213 = sshll.u32 %s205, 4
          %s214 = int_to_ptr.vmem [resolvable:$true] %s213
          %219 = dma.hbm_to_vmem [thread:$0]  %s212, 256, %s214, %s202, 128, 128, 8
        $region32: #{tpu_custom_call.1} parent=27 // pred_fallthru
          _
        // Predicated region
        $region33: #{tpu_custom_call.1} parent=27 // pred_check
          %p220 = pneg %p64
        $region34: #{tpu_custom_call.1} parent=27 // pred_check_branch
          %222 = sbr.rel (%p220) target = $region36
        $region35: #{tpu_custom_call.1} parent=27 // pred_region
          %p223 = scmp.lt.s32.totalorder %s18, 1
          %s224 = scalar_select %p223, %s18, 1
          %s225 = smul.addr %s224, 2
          %s226 = smul.addr %s225, 8
          %s227 = scalar_lea.vmem %s1, %s226
        $region36: #{tpu_custom_call.1} parent=27 // pred_fallthru
          _
      $region28: #{tpu_custom_call.1} parent=5 // pred_fallthru
        _
      %p228 = scmp.le.s32.totalorder 1, %s18
      %p229 = scmp.lt.s32.totalorder %s18, 3
      %p230 = pnand %p228, %p229
      %p231 = pneg %p230
      // Predicated region
      $region37: #{tpu_custom_call.1} parent=5 // pred_check
        _
      $region38: #{tpu_custom_call.1} parent=5 // pred_check_branch
        %233 = sbr.rel (%p230) target = $region40
      $region39: #{tpu_custom_call.1} parent=5 // pred_region
        %s234 = ssub.s32 %s18, 1
        %s235 = sand.u32 %s31, 1
        %s236 = scalar_lea.sflag [#allocation3], %s235
        %s237 = sand.u32 %s31, 1
        %s238 = smul.addr %s237, 16
        %s239 = scalar_lea.vmem [#allocation2], %s238
        // Predicated region
        $region41: #{tpu_custom_call.1} parent=39 // pred_check
          %p240 = pneg %p44
        $region42: #{tpu_custom_call.1} parent=39 // pred_check_branch
          %242 = sbr.rel (%p240) target = $region44
        $region43: #{tpu_custom_call.1} parent=39 // pred_region
          %244 = dma.done %s236, 256
        $region44: #{tpu_custom_call.1} parent=39 // pred_fallthru
          _
        // Predicated region
        $region45: #{tpu_custom_call.1} parent=39 // pred_check
          %p245 = pneg %p133
        $region46: #{tpu_custom_call.1} parent=39 // pred_check_branch
          %247 = sbr.rel (%p245) target = $region48
        $region47: #{tpu_custom_call.1} parent=39 // pred_region
          %249 = dma.done [#allocation6], 768
        $region48: #{tpu_custom_call.1} parent=39 // pred_fallthru
          _
        %s250 = sand.u32 %s31, 1
        %s251 = scalar_lea.sflag [#allocation3], %s250
        %s252 = sand.u32 %s31, 1
        %s253 = smul.addr %s252, 16
        %s254 = scalar_lea.vmem [#allocation2], %s253
        %p255 = pneg %p44
        %p256 = pneg %p41
        %p257 = scmp.lt.s32.totalorder %s23, 1
        %s258 = scalar_select %p257, %s23, 1
        %s259 = smul.addr %s258, 2
        %s260 = smul.addr %s259, 8
        %s261 = scalar_lea.vmem %s1, %s260
        %p262 = pneg %p70
        %p263 = pneg %p67
        %p264 = pneg %p91
        %p265 = pneg %p88
        %p266 = pneg %p112
        %p267 = pneg %p109
        %p268 = pneg %p133
        %p269 = pneg %p130
        %p270 = pneg %p159
        %p271 = pneg %p156
        %s272 = sand.u32 %s146, 1
        %s273 = scalar_lea.sflag [#allocation4], %s272
        %s274 = sand.u32 %s146, 1
        %s275 = smul.addr %s274, 16
        %s276 = scalar_lea.vmem [#allocation7], %s275
        %p277 = scmp.lt.s32.totalorder %s23, 1
        %s278 = scalar_select %p277, %s23, 1
        %s279 = smul.addr %s278, 2
        %s280 = smul.addr %s279, 8
        %s281 = scalar_lea.vmem %s1, %s280
        %v282 = vld [vmem:[%s239] sm:$0xff]
        %v283 = vld [vmem:[%s239 + $0x8] sm:$0xff]
        %v284 = vld [vmem:[%s281] sm:$0xff]
        %v285 = vld [vmem:[%s281 + $0x8] sm:$0xff]
        %v286 = vld [vmem:[%s2] sm:$0xff]
        %v287 = vld [vmem:[%s2 + $0x8] sm:$0xff]
        %288 = vadd.xlane.f32.xlu0 %v282
        %v289 = vpop.xlane.xlu0 %288
        %290 = vadd.xlane.f32.xlu0 %v283
        %v291 = vpop.xlane.xlu0 %290
        %v292 = vmul.f32 %v289, 0.0078125
        %v293 = vmul.f32 %v291, 0.0078125
        %v294 = vmul.f32 %v282, %v282
        %v295 = vmul.f32 %v283, %v283
        %296 = vadd.xlane.f32.xlu0 %v294
        %v297 = vpop.xlane.xlu0 %296
        %298 = vadd.xlane.f32.xlu0 %v295
        %v299 = vpop.xlane.xlu0 %298
        %v300 = vmul.f32 %v297, 0.0078125
        %v301 = vmul.f32 %v299, 0.0078125
        %v302 = vmul.f32 %v292, %v292
        %v303 = vmul.f32 %v293, %v293
        %v304 = vsub.f32 %v300, %v302
        %v305 = vsub.f32 %v301, %v303
        %v306 = vmax.f32 %v304, 0.0
        %v307 = vmax.f32 %v305, 0.0
        %v308 = vsub.f32 %v282, %v292
        %v309 = vsub.f32 %v283, %v293
        %v310 = vadd.f32 %v306, 1e-05
        %v311 = vadd.f32 %v307, 1e-05
        %v312 = vrsqrt.pop %v310
        %v313 = vmul.f32 %v312, %v310
        %v314 = vmul.f32 %v313, %v312
        %v315 = vmul.f32 0.5, %v314
        %v316 = vsub.f32 1.5, %v315
        %v317 = vmul.f32 %v312, %v316
        %vm318 = vweird.f32 %v310
        %vm319 = vweird.f32 %v312
        %vm320 = vmor %vm318, %vm319
        %v321 = vsel %vm320, %v312, %v317
        %v322 = vrsqrt.pop %v311
        %v323 = vmul.f32 %v322, %v311
        %v324 = vmul.f32 %v323, %v322
        %v325 = vmul.f32 0.5, %v324
        %v326 = vsub.f32 1.5, %v325
        %v327 = vmul.f32 %v322, %v326
        %vm328 = vweird.f32 %v311
        %vm329 = vweird.f32 %v322
        %vm330 = vmor %vm328, %vm329
        %v331 = vsel %vm330, %v322, %v327
        %v332 = vmul.f32 %v308, %v321
        %v333 = vmul.f32 %v309, %v331
        %335 = vset.pattern.permute.xlu0 0
        %336 = vperm.xlu0 %335, %v284
        %v337 = vpop.permute.xlu0 %336
        %340 = vset.pattern.permute.xlu0 0
        %341 = vperm.xlu0 %340, %v285
        %v342 = vpop.permute.xlu0 %341
        %v344 = vmul.f32 %v337, %v332
        %v345 = vmul.f32 %v342, %v333
        %346 = vset.pattern.permute.xlu0 1
        %347 = vperm.xlu0 %346, %v284
        %v348 = vpop.permute.xlu0 %347
        %350 = vset.pattern.permute.xlu0 1
        %351 = vperm.xlu0 %350, %v285
        %v352 = vpop.permute.xlu0 %351
        %v354 = vadd.f32 %v344, %v348
        %v355 = vadd.f32 %v345, %v352
        %v356 = vld [vmem:[%s3] sm:$0xff]
        %v357 = vld [vmem:[%s3 + $0x8] sm:$0xff]
        %360 = vrot.lane.b32.xlu0 %v354, 1
        %v361 = vpop.permute.xlu0 %360
        %362 = vrot.lane.b32.xlu0 %v355, 1
        %v363 = vpop.permute.xlu0 %362
        %vm366 = vcmask 7168
        %v367 = vsel %vm366, 0.0, %v361
        %v368 = vsel %vm366, 0.0, %v363
        %v369 = vsel %vm366, %v361, 0.0
        %v370 = vsel %vm366, %v363, 0.0
        %375 = vrot.lane.b32.xlu0 %v367, 127
        %v376 = vpop.permute.xlu0 %375
        %377 = vrot.lane.b32.xlu0 %v369, 127
        %v378 = vpop.permute.xlu0 %377
        %379 = vrot.lane.b32.xlu0 %v368, 127
        %v380 = vpop.permute.xlu0 %379
        %381 = vrot.lane.b32.xlu0 %v370, 127
        %v382 = vpop.permute.xlu0 %381
        %vm383 = vcmask 1039360
        %v384 = vsel %vm383, %v376, %v378
        %v385 = vsel %vm383, %v380, %v382
        %388 = vrot.lane.b32.xlu0 %v367, 126
        %v389 = vpop.permute.xlu0 %388
        %390 = vrot.lane.b32.xlu0 %v369, 126
        %v391 = vpop.permute.xlu0 %390
        %392 = vrot.lane.b32.xlu0 %v368, 126
        %v393 = vpop.permute.xlu0 %392
        %394 = vrot.lane.b32.xlu0 %v370, 126
        %v395 = vpop.permute.xlu0 %394
        %vm396 = vcmask 1031168
        %v397 = vsel %vm396, %v389, %v391
        %v398 = vsel %vm396, %v393, %v395
        %402 = vset.pattern.permute.xlu0 0
        %403 = vperm.xlu0 %402, %v286
        %v404 = vpop.permute.xlu0 %403
        %407 = vset.pattern.permute.xlu0 0
        %408 = vperm.xlu0 %407, %v287
        %v409 = vpop.permute.xlu0 %408
        %vm411 = vcmask 392192
        %v413 = vsel %vm411, %v356, 0
        %v416 = vsel %vm411, %v357, 0
        %418 = vmatpush.msra.mxu0 0.0
        %419 = vmatpush.msra.mxu0 0.0
        %420 = vmatpush.msra.mxu0 0.0
        %421 = vmatpush.msra.mxu0 0.0
        %422 = vmatpush.msra.mxu0 0.0
        %423 = vmatpush.msra.mxu0 0.0
        %424 = vmatpush.msra.mxu0 0.0
        %425 = vmatpush.msra.mxu0 0.0
        %426 = vmatpush.msra.mxu0 0.0
        %427 = vmatpush.msra.mxu0 0.0
        %428 = vmatpush.msra.mxu0 %v398
        %429 = vmatpush.msra.mxu0 %v397
        %430 = vmatpush.msra.mxu0 %v385
        %431 = vmatpush.msra.mxu0 %v384
        %432 = vmatpush.msra.mxu0 %v368
        %433 = vmatpush.msra.mxu0 %v367
        %434 = vmatmul.f32.gmra.mxu0 %v413
        %v435 = vpop.f32.mrf.mxu0
        %v436 = vadd.f32 %v404, %v435
        %437 = vmatmul.f32.gmra.mxu0 %v416
        %v438 = vpop.f32.mrf.mxu0
        %v439 = vadd.f32 %v409, %v438
        %440 = vdwg.mxu0
        %441 = vadd.xlane.f32.xlu0 %v436
        %v442 = vpop.xlane.xlu0 %441
        %443 = vadd.xlane.f32.xlu0 %v439
        %v444 = vpop.xlane.xlu0 %443
        %v445 = vmul.f32 %v442, 0.0078125
        %v446 = vmul.f32 %v444, 0.0078125
        %v447 = vmul.f32 %v436, %v436
        %v448 = vmul.f32 %v439, %v439
        %449 = vadd.xlane.f32.xlu0 %v447
        %v450 = vpop.xlane.xlu0 %449
        %451 = vadd.xlane.f32.xlu0 %v448
        %v452 = vpop.xlane.xlu0 %451
        %v453 = vmul.f32 %v450, 0.0078125
        %v454 = vmul.f32 %v452, 0.0078125
        %v455 = vmul.f32 %v445, %v445
        %v456 = vmul.f32 %v446, %v446
        %v457 = vsub.f32 %v453, %v455
        %v458 = vsub.f32 %v454, %v456
        %v459 = vmax.f32 %v457, 0.0
        %v460 = vmax.f32 %v458, 0.0
        %v461 = vsub.f32 %v436, %v445
        %v462 = vsub.f32 %v439, %v446
        %v463 = vadd.f32 %v459, 1e-05
        %v464 = vadd.f32 %v460, 1e-05
        %v465 = vrsqrt.pop %v463
        %v466 = vmul.f32 %v465, %v463
        %v467 = vmul.f32 %v466, %v465
        %v468 = vmul.f32 0.5, %v467
        %v469 = vsub.f32 1.5, %v468
        %v470 = vmul.f32 %v465, %v469
        %vm471 = vweird.f32 %v463
        %vm472 = vweird.f32 %v465
        %vm473 = vmor %vm471, %vm472
        %v474 = vsel %vm473, %v465, %v470
        %v475 = vrsqrt.pop %v464
        %v476 = vmul.f32 %v475, %v464
        %v477 = vmul.f32 %v476, %v475
        %v478 = vmul.f32 0.5, %v477
        %v479 = vsub.f32 1.5, %v478
        %v480 = vmul.f32 %v475, %v479
        %vm481 = vweird.f32 %v464
        %vm482 = vweird.f32 %v475
        %vm483 = vmor %vm481, %vm482
        %v484 = vsel %vm483, %v475, %v480
        %v485 = vmul.f32 %v461, %v474
        %v486 = vmul.f32 %v462, %v484
        %487 = vset.pattern.permute.xlu0 2
        %488 = vperm.xlu0 %487, %v284
        %v489 = vpop.permute.xlu0 %488
        %491 = vset.pattern.permute.xlu0 2
        %492 = vperm.xlu0 %491, %v285
        %v493 = vpop.permute.xlu0 %492
        %v495 = vmul.f32 %v489, %v485
        %v496 = vmul.f32 %v493, %v486
        %497 = vset.pattern.permute.xlu0 3
        %498 = vperm.xlu0 %497, %v284
        %v499 = vpop.permute.xlu0 %498
        %501 = vset.pattern.permute.xlu0 3
        %502 = vperm.xlu0 %501, %v285
        %v503 = vpop.permute.xlu0 %502
        %v505 = vadd.f32 %v495, %v499
        %v506 = vadd.f32 %v496, %v503
        %v507 = vld [vmem:[#allocation5] sm:$0xff]
        %v508 = vld [vmem:[#allocation5 + $0x8] sm:$0xff]
        %511 = vrot.lane.b32.xlu0 %v505, 1
        %v512 = vpop.permute.xlu0 %511
        %513 = vrot.lane.b32.xlu0 %v506, 1
        %v514 = vpop.permute.xlu0 %513
        %v517 = vsel %vm366, 0.0, %v512
        %v518 = vsel %vm366, 0.0, %v514
        %v519 = vsel %vm366, %v512, 0.0
        %v520 = vsel %vm366, %v514, 0.0
        %525 = vrot.lane.b32.xlu0 %v517, 127
        %v526 = vpop.permute.xlu0 %525
        %527 = vrot.lane.b32.xlu0 %v519, 127
        %v528 = vpop.permute.xlu0 %527
        %529 = vrot.lane.b32.xlu0 %v518, 127
        %v530 = vpop.permute.xlu0 %529
        %531 = vrot.lane.b32.xlu0 %v520, 127
        %v532 = vpop.permute.xlu0 %531
        %v533 = vsel %vm383, %v526, %v528
        %v534 = vsel %vm383, %v530, %v532
        %537 = vrot.lane.b32.xlu0 %v517, 126
        %v538 = vpop.permute.xlu0 %537
        %539 = vrot.lane.b32.xlu0 %v519, 126
        %v540 = vpop.permute.xlu0 %539
        %541 = vrot.lane.b32.xlu0 %v518, 126
        %v542 = vpop.permute.xlu0 %541
        %543 = vrot.lane.b32.xlu0 %v520, 126
        %v544 = vpop.permute.xlu0 %543
        %v545 = vsel %vm396, %v538, %v540
        %v546 = vsel %vm396, %v542, %v544
        %549 = vset.pattern.permute.xlu0 1
        %550 = vperm.xlu0 %549, %v286
        %v551 = vpop.permute.xlu0 %550
        %553 = vset.pattern.permute.xlu0 1
        %554 = vperm.xlu0 %553, %v287
        %v555 = vpop.permute.xlu0 %554
        %v558 = vsel %vm411, %v507, 0
        %v561 = vsel %vm411, %v508, 0
        %563 = vmatpush.msra.mxu0 0.0
        %564 = vmatpush.msra.mxu0 0.0
        %565 = vmatpush.msra.mxu0 0.0
        %566 = vmatpush.msra.mxu0 0.0
        %567 = vmatpush.msra.mxu0 0.0
        %568 = vmatpush.msra.mxu0 0.0
        %569 = vmatpush.msra.mxu0 0.0
        %570 = vmatpush.msra.mxu0 0.0
        %571 = vmatpush.msra.mxu0 0.0
        %572 = vmatpush.msra.mxu0 0.0
        %573 = vmatpush.msra.mxu0 %v546
        %574 = vmatpush.msra.mxu0 %v545
        %575 = vmatpush.msra.mxu0 %v534
        %576 = vmatpush.msra.mxu0 %v533
        %577 = vmatpush.msra.mxu0 %v518
        %578 = vmatpush.msra.mxu0 %v517
        %579 = vmatmul.f32.gmra.mxu0 %v558
        %v580 = vpop.f32.mrf.mxu0
        %v581 = vadd.f32 %v551, %v580
        %582 = vmatmul.f32.gmra.mxu0 %v561
        %v583 = vpop.f32.mrf.mxu0
        %v584 = vadd.f32 %v555, %v583
        %585 = vdwg.mxu0
        %v586 = vadd.f32 %v282, %v581
        %v587 = vadd.f32 %v283, %v584
        %588 = vadd.xlane.f32.xlu0 %v586
        %v589 = vpop.xlane.xlu0 %588
        %590 = vadd.xlane.f32.xlu0 %v587
        %v591 = vpop.xlane.xlu0 %590
        %v592 = vmul.f32 %v589, 0.0078125
        %v593 = vmul.f32 %v591, 0.0078125
        %v594 = vmul.f32 %v586, %v586
        %v595 = vmul.f32 %v587, %v587
        %596 = vadd.xlane.f32.xlu0 %v594
        %v597 = vpop.xlane.xlu0 %596
        %598 = vadd.xlane.f32.xlu0 %v595
        %v599 = vpop.xlane.xlu0 %598
        %v600 = vmul.f32 %v597, 0.0078125
        %v601 = vmul.f32 %v599, 0.0078125
        %v602 = vmul.f32 %v592, %v592
        %v603 = vmul.f32 %v593, %v593
        %v604 = vsub.f32 %v600, %v602
        %v605 = vsub.f32 %v601, %v603
        %v606 = vmax.f32 %v604, 0.0
        %v607 = vmax.f32 %v605, 0.0
        %v608 = vsub.f32 %v586, %v592
        %v609 = vsub.f32 %v587, %v593
        %v610 = vadd.f32 %v606, 1e-05
        %v611 = vadd.f32 %v607, 1e-05
        %v612 = vrsqrt.pop %v610
        %v613 = vmul.f32 %v612, %v610
        %v614 = vmul.f32 %v613, %v612
        %v615 = vmul.f32 0.5, %v614
        %v616 = vsub.f32 1.5, %v615
        %v617 = vmul.f32 %v612, %v616
        %vm618 = vweird.f32 %v610
        %vm619 = vweird.f32 %v612
        %vm620 = vmor %vm618, %vm619
        %v621 = vsel %vm620, %v612, %v617
        %v622 = vrsqrt.pop %v611
        %v623 = vmul.f32 %v622, %v611
        %v624 = vmul.f32 %v623, %v622
        %v625 = vmul.f32 0.5, %v624
        %v626 = vsub.f32 1.5, %v625
        %v627 = vmul.f32 %v622, %v626
        %vm628 = vweird.f32 %v611
        %vm629 = vweird.f32 %v622
        %vm630 = vmor %vm628, %vm629
        %v631 = vsel %vm630, %v622, %v627
        %v632 = vmul.f32 %v608, %v621
        %v633 = vmul.f32 %v609, %v631
        %634 = vset.pattern.permute.xlu0 4
        %635 = vperm.xlu0 %634, %v284
        %v636 = vpop.permute.xlu0 %635
        %638 = vset.pattern.permute.xlu0 4
        %639 = vperm.xlu0 %638, %v285
        %v640 = vpop.permute.xlu0 %639
        %v642 = vmul.f32 %v636, %v632
        %v643 = vmul.f32 %v640, %v633
        %644 = vset.pattern.permute.xlu0 5
        %645 = vperm.xlu0 %644, %v284
        %v646 = vpop.permute.xlu0 %645
        %648 = vset.pattern.permute.xlu0 5
        %649 = vperm.xlu0 %648, %v285
        %v650 = vpop.permute.xlu0 %649
        %v652 = vadd.f32 %v642, %v646
        %v653 = vadd.f32 %v643, %v650
        %s654 = scalar_lea.vmem %s3, 16
        %v655 = vld [vmem:[%s654] sm:$0xff]
        %v656 = vld [vmem:[%s654 + $0x8] sm:$0xff]
        %659 = vrot.lane.b32.xlu0 %v652, 3
        %v660 = vpop.permute.xlu0 %659
        %661 = vrot.lane.b32.xlu0 %v653, 3
        %v662 = vpop.permute.xlu0 %661
        %vm665 = vcmask 23552
        %v666 = vsel %vm665, 0.0, %v660
        %v667 = vsel %vm665, 0.0, %v662
        %v668 = vsel %vm665, %v660, 0.0
        %v669 = vsel %vm665, %v662, 0.0
        %674 = vrot.lane.b32.xlu0 %v666, 125
        %v675 = vpop.permute.xlu0 %674
        %676 = vrot.lane.b32.xlu0 %v668, 125
        %v677 = vpop.permute.xlu0 %676
        %678 = vrot.lane.b32.xlu0 %v667, 125
        %v679 = vpop.permute.xlu0 %678
        %680 = vrot.lane.b32.xlu0 %v669, 125
        %v681 = vpop.permute.xlu0 %680
        %vm682 = vcmask 1022976
        %v683 = vsel %vm682, %v675, %v677
        %v684 = vsel %vm682, %v679, %v681
        %687 = vrot.lane.b32.xlu0 %v666, 122
        %v688 = vpop.permute.xlu0 %687
        %689 = vrot.lane.b32.xlu0 %v668, 122
        %v690 = vpop.permute.xlu0 %689
        %691 = vrot.lane.b32.xlu0 %v667, 122
        %v692 = vpop.permute.xlu0 %691
        %693 = vrot.lane.b32.xlu0 %v669, 122
        %v694 = vpop.permute.xlu0 %693
        %vm695 = vcmask 998400
        %v696 = vsel %vm695, %v688, %v690
        %v697 = vsel %vm695, %v692, %v694
        %700 = vset.pattern.permute.xlu0 2
        %701 = vperm.xlu0 %700, %v286
        %v702 = vpop.permute.xlu0 %701
        %704 = vset.pattern.permute.xlu0 2
        %705 = vperm.xlu0 %704, %v287
        %v706 = vpop.permute.xlu0 %705
        %v709 = vsel %vm411, %v655, 0
        %v712 = vsel %vm411, %v656, 0
        %714 = vmatpush.msra.mxu0 0.0
        %715 = vmatpush.msra.mxu0 0.0
        %716 = vmatpush.msra.mxu0 0.0
        %717 = vmatpush.msra.mxu0 0.0
        %718 = vmatpush.msra.mxu0 0.0
        %719 = vmatpush.msra.mxu0 0.0
        %720 = vmatpush.msra.mxu0 0.0
        %721 = vmatpush.msra.mxu0 0.0
        %722 = vmatpush.msra.mxu0 0.0
        %723 = vmatpush.msra.mxu0 0.0
        %724 = vmatpush.msra.mxu0 %v697
        %725 = vmatpush.msra.mxu0 %v696
        %726 = vmatpush.msra.mxu0 %v684
        %727 = vmatpush.msra.mxu0 %v683
        %728 = vmatpush.msra.mxu0 %v667
        %729 = vmatpush.msra.mxu0 %v666
        %730 = vmatmul.f32.gmra.mxu0 %v709
        %v731 = vpop.f32.mrf.mxu0
        %v732 = vadd.f32 %v702, %v731
        %733 = vmatmul.f32.gmra.mxu0 %v712
        %v734 = vpop.f32.mrf.mxu0
        %v735 = vadd.f32 %v706, %v734
        %736 = vdwg.mxu0
        %737 = vadd.xlane.f32.xlu0 %v732
        %v738 = vpop.xlane.xlu0 %737
        %739 = vadd.xlane.f32.xlu0 %v735
        %v740 = vpop.xlane.xlu0 %739
        %v741 = vmul.f32 %v738, 0.0078125
        %v742 = vmul.f32 %v740, 0.0078125
        %v743 = vmul.f32 %v732, %v732
        %v744 = vmul.f32 %v735, %v735
        %745 = vadd.xlane.f32.xlu0 %v743
        %v746 = vpop.xlane.xlu0 %745
        %747 = vadd.xlane.f32.xlu0 %v744
        %v748 = vpop.xlane.xlu0 %747
        %v749 = vmul.f32 %v746, 0.0078125
        %v750 = vmul.f32 %v748, 0.0078125
        %v751 = vmul.f32 %v741, %v741
        %v752 = vmul.f32 %v742, %v742
        %v753 = vsub.f32 %v749, %v751
        %v754 = vsub.f32 %v750, %v752
        %v755 = vmax.f32 %v753, 0.0
        %v756 = vmax.f32 %v754, 0.0
        %v757 = vsub.f32 %v732, %v741
        %v758 = vsub.f32 %v735, %v742
        %v759 = vadd.f32 %v755, 1e-05
        %v760 = vadd.f32 %v756, 1e-05
        %v761 = vrsqrt.pop %v759
        %v762 = vmul.f32 %v761, %v759
        %v763 = vmul.f32 %v762, %v761
        %v764 = vmul.f32 0.5, %v763
        %v765 = vsub.f32 1.5, %v764
        %v766 = vmul.f32 %v761, %v765
        %vm767 = vweird.f32 %v759
        %vm768 = vweird.f32 %v761
        %vm769 = vmor %vm767, %vm768
        %v770 = vsel %vm769, %v761, %v766
        %v771 = vrsqrt.pop %v760
        %v772 = vmul.f32 %v771, %v760
        %v773 = vmul.f32 %v772, %v771
        %v774 = vmul.f32 0.5, %v773
        %v775 = vsub.f32 1.5, %v774
        %v776 = vmul.f32 %v771, %v775
        %vm777 = vweird.f32 %v760
        %vm778 = vweird.f32 %v771
        %vm779 = vmor %vm777, %vm778
        %v780 = vsel %vm779, %v771, %v776
        %v781 = vmul.f32 %v757, %v770
        %v782 = vmul.f32 %v758, %v780
        %783 = vset.pattern.permute.xlu0 6
        %784 = vperm.xlu0 %783, %v284
        %v785 = vpop.permute.xlu0 %784
        %787 = vset.pattern.permute.xlu0 6
        %788 = vperm.xlu0 %787, %v285
        %v789 = vpop.permute.xlu0 %788
        %v791 = vmul.f32 %v785, %v781
        %v792 = vmul.f32 %v789, %v782
        %793 = vset.pattern.permute.xlu0 7
        %794 = vperm.xlu0 %793, %v284
        %v795 = vpop.permute.xlu0 %794
        %797 = vset.pattern.permute.xlu0 7
        %798 = vperm.xlu0 %797, %v285
        %v799 = vpop.permute.xlu0 %798
        %v801 = vadd.f32 %v791, %v795
        %v802 = vadd.f32 %v792, %v799
        %s803 = scalar_lea.vmem [#allocation5], 16
        %v804 = vld [vmem:[%s803] sm:$0xff]
        %v805 = vld [vmem:[%s803 + $0x8] sm:$0xff]
        %808 = vrot.lane.b32.xlu0 %v801, 1
        %v809 = vpop.permute.xlu0 %808
        %810 = vrot.lane.b32.xlu0 %v802, 1
        %v811 = vpop.permute.xlu0 %810
        %v814 = vsel %vm366, 0.0, %v809
        %v815 = vsel %vm366, 0.0, %v811
        %v816 = vsel %vm366, %v809, 0.0
        %v817 = vsel %vm366, %v811, 0.0
        %822 = vrot.lane.b32.xlu0 %v814, 127
        %v823 = vpop.permute.xlu0 %822
        %824 = vrot.lane.b32.xlu0 %v816, 127
        %v825 = vpop.permute.xlu0 %824
        %826 = vrot.lane.b32.xlu0 %v815, 127
        %v827 = vpop.permute.xlu0 %826
        %828 = vrot.lane.b32.xlu0 %v817, 127
        %v829 = vpop.permute.xlu0 %828
        %v830 = vsel %vm383, %v823, %v825
        %v831 = vsel %vm383, %v827, %v829
        %834 = vrot.lane.b32.xlu0 %v814, 126
        %v835 = vpop.permute.xlu0 %834
        %836 = vrot.lane.b32.xlu0 %v816, 126
        %v837 = vpop.permute.xlu0 %836
        %838 = vrot.lane.b32.xlu0 %v815, 126
        %v839 = vpop.permute.xlu0 %838
        %840 = vrot.lane.b32.xlu0 %v817, 126
        %v841 = vpop.permute.xlu0 %840
        %v842 = vsel %vm396, %v835, %v837
        %v843 = vsel %vm396, %v839, %v841
        %846 = vset.pattern.permute.xlu0 3
        %847 = vperm.xlu0 %846, %v286
        %v848 = vpop.permute.xlu0 %847
        %850 = vset.pattern.permute.xlu0 3
        %851 = vperm.xlu0 %850, %v287
        %v852 = vpop.permute.xlu0 %851
        %v855 = vsel %vm411, %v804, 0
        %v858 = vsel %vm411, %v805, 0
        %860 = vmatpush.msra.mxu0 0.0
        %861 = vmatpush.msra.mxu0 0.0
        %862 = vmatpush.msra.mxu0 0.0
        %863 = vmatpush.msra.mxu0 0.0
        %864 = vmatpush.msra.mxu0 0.0
        %865 = vmatpush.msra.mxu0 0.0
        %866 = vmatpush.msra.mxu0 0.0
        %867 = vmatpush.msra.mxu0 0.0
        %868 = vmatpush.msra.mxu0 0.0
        %869 = vmatpush.msra.mxu0 0.0
        %870 = vmatpush.msra.mxu0 %v843
        %871 = vmatpush.msra.mxu0 %v842
        %872 = vmatpush.msra.mxu0 %v831
        %873 = vmatpush.msra.mxu0 %v830
        %874 = vmatpush.msra.mxu0 %v815
        %875 = vmatpush.msra.mxu0 %v814
        %876 = vmatmul.f32.gmra.mxu0 %v855
        %v877 = vpop.f32.mrf.mxu0
        %v878 = vadd.f32 %v848, %v877
        %879 = vmatmul.f32.gmra.mxu0 %v858
        %v880 = vpop.f32.mrf.mxu0
        %v881 = vadd.f32 %v852, %v880
        %882 = vdwg.mxu0
        %v883 = vadd.f32 %v586, %v878
        %v884 = vadd.f32 %v587, %v881
        %885 = vadd.xlane.f32.xlu0 %v883
        %v886 = vpop.xlane.xlu0 %885
        %887 = vadd.xlane.f32.xlu0 %v884
        %v888 = vpop.xlane.xlu0 %887
        %v889 = vmul.f32 %v886, 0.0078125
        %v890 = vmul.f32 %v888, 0.0078125
        %v891 = vmul.f32 %v883, %v883
        %v892 = vmul.f32 %v884, %v884
        %893 = vadd.xlane.f32.xlu0 %v891
        %v894 = vpop.xlane.xlu0 %893
        %895 = vadd.xlane.f32.xlu0 %v892
        %v896 = vpop.xlane.xlu0 %895
        %v897 = vmul.f32 %v894, 0.0078125
        %v898 = vmul.f32 %v896, 0.0078125
        %v899 = vmul.f32 %v889, %v889
        %v900 = vmul.f32 %v890, %v890
        %v901 = vsub.f32 %v897, %v899
        %v902 = vsub.f32 %v898, %v900
        %v903 = vmax.f32 %v901, 0.0
        %v904 = vmax.f32 %v902, 0.0
        %v905 = vsub.f32 %v883, %v889
        %v906 = vsub.f32 %v884, %v890
        %v907 = vadd.f32 %v903, 1e-05
        %v908 = vadd.f32 %v904, 1e-05
        %v909 = vrsqrt.pop %v907
        %v910 = vmul.f32 %v909, %v907
        %v911 = vmul.f32 %v910, %v909
        %v912 = vmul.f32 0.5, %v911
        %v913 = vsub.f32 1.5, %v912
        %v914 = vmul.f32 %v909, %v913
        %vm915 = vweird.f32 %v907
        %vm916 = vweird.f32 %v909
        %vm917 = vmor %vm915, %vm916
        %v918 = vsel %vm917, %v909, %v914
        %v919 = vrsqrt.pop %v908
        %v920 = vmul.f32 %v919, %v908
        %v921 = vmul.f32 %v920, %v919
        %v922 = vmul.f32 0.5, %v921
        %v923 = vsub.f32 1.5, %v922
        %v924 = vmul.f32 %v919, %v923
        %vm925 = vweird.f32 %v908
        %vm926 = vweird.f32 %v919
        %vm927 = vmor %vm925, %vm926
        %v928 = vsel %vm927, %v919, %v924
        %v929 = vmul.f32 %v905, %v918
        %v930 = vmul.f32 %v906, %v928
        %931 = vset.pattern.permute.xlu0 8
        %932 = vperm.xlu0 %931, %v284
        %v933 = vpop.permute.xlu0 %932
        %935 = vset.pattern.permute.xlu0 8
        %936 = vperm.xlu0 %935, %v285
        %v937 = vpop.permute.xlu0 %936
        %v939 = vmul.f32 %v933, %v929
        %v940 = vmul.f32 %v937, %v930
        %941 = vset.pattern.permute.xlu0 9
        %942 = vperm.xlu0 %941, %v284
        %v943 = vpop.permute.xlu0 %942
        %945 = vset.pattern.permute.xlu0 9
        %946 = vperm.xlu0 %945, %v285
        %v947 = vpop.permute.xlu0 %946
        %v949 = vadd.f32 %v939, %v943
        %v950 = vadd.f32 %v940, %v947
        %s951 = scalar_lea.vmem %s3, 32
        %v952 = vld [vmem:[%s951] sm:$0xff]
        %v953 = vld [vmem:[%s951 + $0x8] sm:$0xff]
        %956 = vrot.lane.b32.xlu0 %v949, 5
        %v957 = vpop.permute.xlu0 %956
        %958 = vrot.lane.b32.xlu0 %v950, 5
        %v959 = vpop.permute.xlu0 %958
        %vm962 = vcmask 39936
        %v963 = vsel %vm962, 0.0, %v957
        %v964 = vsel %vm962, 0.0, %v959
        %v965 = vsel %vm962, %v957, 0.0
        %v966 = vsel %vm962, %v959, 0.0
        %971 = vrot.lane.b32.xlu0 %v963, 123
        %v972 = vpop.permute.xlu0 %971
        %973 = vrot.lane.b32.xlu0 %v965, 123
        %v974 = vpop.permute.xlu0 %973
        %975 = vrot.lane.b32.xlu0 %v964, 123
        %v976 = vpop.permute.xlu0 %975
        %977 = vrot.lane.b32.xlu0 %v966, 123
        %v978 = vpop.permute.xlu0 %977
        %vm979 = vcmask 1006592
        %v980 = vsel %vm979, %v972, %v974
        %v981 = vsel %vm979, %v976, %v978
        %984 = vrot.lane.b32.xlu0 %v963, 118
        %v985 = vpop.permute.xlu0 %984
        %986 = vrot.lane.b32.xlu0 %v965, 118
        %v987 = vpop.permute.xlu0 %986
        %988 = vrot.lane.b32.xlu0 %v964, 118
        %v989 = vpop.permute.xlu0 %988
        %990 = vrot.lane.b32.xlu0 %v966, 118
        %v991 = vpop.permute.xlu0 %990
        %vm992 = vcmask 965632
        %v993 = vsel %vm992, %v985, %v987
        %v994 = vsel %vm992, %v989, %v991
        %997 = vset.pattern.permute.xlu0 4
        %998 = vperm.xlu0 %997, %v286
        %v999 = vpop.permute.xlu0 %998
        %1001 = vset.pattern.permute.xlu0 4
        %1002 = vperm.xlu0 %1001, %v287
        %v1003 = vpop.permute.xlu0 %1002
        %v1006 = vsel %vm411, %v952, 0
        %v1009 = vsel %vm411, %v953, 0
        %1011 = vmatpush.msra.mxu0 0.0
        %1012 = vmatpush.msra.mxu0 0.0
        %1013 = vmatpush.msra.mxu0 0.0
        %1014 = vmatpush.msra.mxu0 0.0
        %1015 = vmatpush.msra.mxu0 0.0
        %1016 = vmatpush.msra.mxu0 0.0
        %1017 = vmatpush.msra.mxu0 0.0
        %1018 = vmatpush.msra.mxu0 0.0
        %1019 = vmatpush.msra.mxu0 0.0
        %1020 = vmatpush.msra.mxu0 0.0
        %1021 = vmatpush.msra.mxu0 %v994
        %1022 = vmatpush.msra.mxu0 %v993
        %1023 = vmatpush.msra.mxu0 %v981
        %1024 = vmatpush.msra.mxu0 %v980
        %1025 = vmatpush.msra.mxu0 %v964
        %1026 = vmatpush.msra.mxu0 %v963
        %1027 = vmatmul.f32.gmra.mxu0 %v1006
        %v1028 = vpop.f32.mrf.mxu0
        %v1029 = vadd.f32 %v999, %v1028
        %1030 = vmatmul.f32.gmra.mxu0 %v1009
        %v1031 = vpop.f32.mrf.mxu0
        %v1032 = vadd.f32 %v1003, %v1031
        %1033 = vdwg.mxu0
        %1034 = vadd.xlane.f32.xlu0 %v1029
        %v1035 = vpop.xlane.xlu0 %1034
        %1036 = vadd.xlane.f32.xlu0 %v1032
        %v1037 = vpop.xlane.xlu0 %1036
        %v1038 = vmul.f32 %v1035, 0.0078125
        %v1039 = vmul.f32 %v1037, 0.0078125
        %v1040 = vmul.f32 %v1029, %v1029
        %v1041 = vmul.f32 %v1032, %v1032
        %1042 = vadd.xlane.f32.xlu0 %v1040
        %v1043 = vpop.xlane.xlu0 %1042
        %1044 = vadd.xlane.f32.xlu0 %v1041
        %v1045 = vpop.xlane.xlu0 %1044
        %v1046 = vmul.f32 %v1043, 0.0078125
        %v1047 = vmul.f32 %v1045, 0.0078125
        %v1048 = vmul.f32 %v1038, %v1038
        %v1049 = vmul.f32 %v1039, %v1039
        %v1050 = vsub.f32 %v1046, %v1048
        %v1051 = vsub.f32 %v1047, %v1049
        %v1052 = vmax.f32 %v1050, 0.0
        %v1053 = vmax.f32 %v1051, 0.0
        %v1054 = vsub.f32 %v1029, %v1038
        %v1055 = vsub.f32 %v1032, %v1039
        %v1056 = vadd.f32 %v1052, 1e-05
        %v1057 = vadd.f32 %v1053, 1e-05
        %v1058 = vrsqrt.pop %v1056
        %v1059 = vmul.f32 %v1058, %v1056
        %v1060 = vmul.f32 %v1059, %v1058
        %v1061 = vmul.f32 0.5, %v1060
        %v1062 = vsub.f32 1.5, %v1061
        %v1063 = vmul.f32 %v1058, %v1062
        %vm1064 = vweird.f32 %v1056
        %vm1065 = vweird.f32 %v1058
        %vm1066 = vmor %vm1064, %vm1065
        %v1067 = vsel %vm1066, %v1058, %v1063
        %v1068 = vrsqrt.pop %v1057
        %v1069 = vmul.f32 %v1068, %v1057
        %v1070 = vmul.f32 %v1069, %v1068
        %v1071 = vmul.f32 0.5, %v1070
        %v1072 = vsub.f32 1.5, %v1071
        %v1073 = vmul.f32 %v1068, %v1072
        %vm1074 = vweird.f32 %v1057
        %vm1075 = vweird.f32 %v1068
        %vm1076 = vmor %vm1074, %vm1075
        %v1077 = vsel %vm1076, %v1068, %v1073
        %v1078 = vmul.f32 %v1054, %v1067
        %v1079 = vmul.f32 %v1055, %v1077
        %1080 = vset.pattern.permute.xlu0 10
        %1081 = vperm.xlu0 %1080, %v284
        %v1082 = vpop.permute.xlu0 %1081
        %1084 = vset.pattern.permute.xlu0 10
        %1085 = vperm.xlu0 %1084, %v285
        %v1086 = vpop.permute.xlu0 %1085
        %v1088 = vmul.f32 %v1082, %v1078
        %v1089 = vmul.f32 %v1086, %v1079
        %1090 = vset.pattern.permute.xlu0 11
        %1091 = vperm.xlu0 %1090, %v284
        %v1092 = vpop.permute.xlu0 %1091
        %1094 = vset.pattern.permute.xlu0 11
        %1095 = vperm.xlu0 %1094, %v285
        %v1096 = vpop.permute.xlu0 %1095
        %v1098 = vadd.f32 %v1088, %v1092
        %v1099 = vadd.f32 %v1089, %v1096
        %s1100 = scalar_lea.vmem [#allocation5], 32
        %v1101 = vld [vmem:[%s1100] sm:$0xff]
        %v1102 = vld [vmem:[%s1100 + $0x8] sm:$0xff]
        %1105 = vrot.lane.b32.xlu0 %v1098, 1
        %v1106 = vpop.permute.xlu0 %1105
        %1107 = vrot.lane.b32.xlu0 %v1099, 1
        %v1108 = vpop.permute.xlu0 %1107
        %v1111 = vsel %vm366, 0.0, %v1106
        %v1112 = vsel %vm366, 0.0, %v1108
        %v1113 = vsel %vm366, %v1106, 0.0
        %v1114 = vsel %vm366, %v1108, 0.0
        %1119 = vrot.lane.b32.xlu0 %v1111, 127
        %v1120 = vpop.permute.xlu0 %1119
        %1121 = vrot.lane.b32.xlu0 %v1113, 127
        %v1122 = vpop.permute.xlu0 %1121
        %1123 = vrot.lane.b32.xlu0 %v1112, 127
        %v1124 = vpop.permute.xlu0 %1123
        %1125 = vrot.lane.b32.xlu0 %v1114, 127
        %v1126 = vpop.permute.xlu0 %1125
        %v1127 = vsel %vm383, %v1120, %v1122
        %v1128 = vsel %vm383, %v1124, %v1126
        %1131 = vrot.lane.b32.xlu0 %v1111, 126
        %v1132 = vpop.permute.xlu0 %1131
        %1133 = vrot.lane.b32.xlu0 %v1113, 126
        %v1134 = vpop.permute.xlu0 %1133
        %1135 = vrot.lane.b32.xlu0 %v1112, 126
        %v1136 = vpop.permute.xlu0 %1135
        %1137 = vrot.lane.b32.xlu0 %v1114, 126
        %v1138 = vpop.permute.xlu0 %1137
        %v1139 = vsel %vm396, %v1132, %v1134
        %v1140 = vsel %vm396, %v1136, %v1138
        %1143 = vset.pattern.permute.xlu0 5
        %1144 = vperm.xlu0 %1143, %v286
        %v1145 = vpop.permute.xlu0 %1144
        %1147 = vset.pattern.permute.xlu0 5
        %1148 = vperm.xlu0 %1147, %v287
        %v1149 = vpop.permute.xlu0 %1148
        %v1152 = vsel %vm411, %v1101, 0
        %v1155 = vsel %vm411, %v1102, 0
        %1157 = vmatpush.msra.mxu0 0.0
        %1158 = vmatpush.msra.mxu0 0.0
        %1159 = vmatpush.msra.mxu0 0.0
        %1160 = vmatpush.msra.mxu0 0.0
        %1161 = vmatpush.msra.mxu0 0.0
        %1162 = vmatpush.msra.mxu0 0.0
        %1163 = vmatpush.msra.mxu0 0.0
        %1164 = vmatpush.msra.mxu0 0.0
        %1165 = vmatpush.msra.mxu0 0.0
        %1166 = vmatpush.msra.mxu0 0.0
        %1167 = vmatpush.msra.mxu0 %v1140
        %1168 = vmatpush.msra.mxu0 %v1139
        %1169 = vmatpush.msra.mxu0 %v1128
        %1170 = vmatpush.msra.mxu0 %v1127
        %1171 = vmatpush.msra.mxu0 %v1112
        %1172 = vmatpush.msra.mxu0 %v1111
        %1173 = vmatmul.f32.gmra.mxu0 %v1152
        %v1174 = vpop.f32.mrf.mxu0
        %v1175 = vadd.f32 %v1145, %v1174
        %1176 = vmatmul.f32.gmra.mxu0 %v1155
        %v1177 = vpop.f32.mrf.mxu0
        %v1178 = vadd.f32 %v1149, %v1177
        %1179 = vdwg.mxu0
        %v1180 = vadd.f32 %v883, %v1175
        %v1181 = vadd.f32 %v884, %v1178
        %1182 = vst [vmem:[%s276] sm:$0xff] %v1180
        %1183 = vst [vmem:[%s276 + $0x8] sm:$0xff] %v1181
        %s1184 = sand.u32 %s146, 1
        %s1185 = scalar_lea.sflag [#allocation4], %s1184
        %s1186 = sand.u32 %s146, 1
        %s1187 = smul.addr %s1186, 16
        %s1188 = scalar_lea.vmem [#allocation7], %s1187
        // Predicated region
        $region49: #{tpu_custom_call.1} parent=39 // pred_check
          %p1189 = pneg %p156
        $region50: #{tpu_custom_call.1} parent=39 // pred_check_branch
          %1191 = sbr.rel (%p1189) target = $region52
        $region51: #{tpu_custom_call.1} parent=39 // pred_region
          %1193 = vsyncadd %s1185, 0
          %s1194 = smul.addr %s23, 2
          %s1195 = smul.addr %s1194, 8
          %s1196 = scalar_lea.hbm %s5, %s1195
          %s1197 = sshll.u32 %s1188, 4
          %s1198 = int_to_ptr.vmem [resolvable:$true] %s1197
          %s1199 = sshll.u32 %s1196, 4
          %s1200 = int_to_ptr.hbm [resolvable:$true] %s1199
          %1205 = dma.vmem_to_hbm [thread:$0]  %s1198, 256, %s1200, %s1185, 128, 128, 8
        $region52: #{tpu_custom_call.1} parent=39 // pred_fallthru
          _
      $region40: #{tpu_custom_call.1} parent=5 // pred_fallthru
        _
      %p1206 = scmp.le.s32.totalorder 2, %s18
      // Predicated region
      $region53: #{tpu_custom_call.1} parent=5 // pred_check
        %p1207 = pneg %p1206
      $region54: #{tpu_custom_call.1} parent=5 // pred_check_branch
        %1209 = sbr.rel (%p1207) target = $region56
      $region55: #{tpu_custom_call.1} parent=5 // pred_region
        %s1210 = ssub.s32 %s18, 2
        // Predicated region
        $region57: #{tpu_custom_call.1} parent=55 // pred_check
          %p1211 = pneg %p162
        $region58: #{tpu_custom_call.1} parent=55 // pred_check_branch
          %1213 = sbr.rel (%p1211) target = $region60
        $region59: #{tpu_custom_call.1} parent=55 // pred_region
          %s1214 = sand.u32 %s147, 1
          %s1215 = scalar_lea.sflag [#allocation4], %s1214
          %s1216 = sand.u32 %s147, 1
          %s1217 = smul.addr %s1216, 16
          %s1218 = scalar_lea.vmem [#allocation7], %s1217
          %1220 = dma.done %s1215, 256
        $region60: #{tpu_custom_call.1} parent=55 // pred_fallthru
          _
      $region56: #{tpu_custom_call.1} parent=5 // pred_fallthru
        _
    $region6: #{tpu_custom_call.1} parent=1 // loop_footer
      %s22 = sadd.s32 1, %s18
    $region7: #{tpu_custom_call.1} parent=1 // loop_footer_branch
      %17 = sbr.rel target = $region3
    $region8: #{tpu_custom_call.1} parent=1 // loop_exit
      _
    %1221 = vsyncpa [#allocation3], 1
    %s1222 = scalar_lea.sflag [#allocation3], 1
    %1223 = vsyncpa %s1222, 1
    %1224 = vsyncpa [#allocation6], 1
    %1225 = vsyncpa [#allocation4], 1
    %s1226 = scalar_lea.sflag [#allocation4], 1
    %1227 = vsyncpa %s1226, 1

</llo_original>
